<compile_context>
chip_gen: v5e
topology: v5e:2x2
jax: 0.10.0
libtpu: 0.0.40
codegen_flags: <defaults>
</compile_context>

<pallas_src>
import functools

import numpy as np
import jax
import jax.numpy as jnp
from jax import lax
from jax.experimental import pallas as pl
from jax.experimental.pallas import tpu as pltpu


def _ldpc_bp_kernel(llr_ref, h_ref, out_ref, *, max_iters):
    V, Bt = llr_ref.shape            # codeword length, batch tile (lanes)
    C = h_ref.shape[0]               # number of check nodes

    # ---- loop-invariant data, hoisted out of the BP loop (Mosaic does not
    # reliably CSE these broadcasts / compares inside the scf.for body). ----
    Hb = jnp.broadcast_to(h_ref[...], (C, V, Bt))          # (C, V, Bt) in {0,1}
    edge = Hb == 1.0                                       # Tanner-graph edges
    llr = llr_ref[...]                                     # (V, Bt)
    llr_b = llr[None, :, :]                                # (1, V, Bt)

    def phi(x):
        # phi(x) = log(|tanh(x/2)|) on edges (H == 1), 0 elsewhere (EUP ops).
        return jnp.where(edge, jnp.log(jnp.abs(jnp.tanh(x * 0.5))), 0.0)

    def sum_over_v(x):
        # Sum over the variable-node (sublane) axis, keepdims.  V is tiny and
        # static, so this unrolls into a handful of sublane-row adds.
        # TODO(synk): real (sparse, large-V) LDPC codes should use a packed
        # per-edge layout + scalar-prefetched index tables instead.
        s = x[:, 0:1, :]
        for v in range(1, V):
            s = s + x[:, v:v + 1, :]
        return s                                           # (C, 1, Bt)

    def body(_, carry):
        llr_tot_prev, msgs, done = carry   # (V,Bt), (C,V,Bt), (1,Bt) 0/1 flags
        # Invariant: msgs == 0 off-edge (init is H*llr; update re-masks with H).

        # ---- check-node update (log/tanh magnitude domain) ----
        log_m = phi(msgs)                                  # (C, V, Bt), 0 off-edge
        row_log = sum_over_v(log_m)                        # (C, 1, Bt)
        # Off-edge values of ext_log are irrelevant: phi() re-masks them to 0.
        ext_log = row_log - log_m                          # (C, V, Bt)
        phi_ext = phi(ext_log)                             # (C, V, Bt), 0 off-edge

        # ---- extrinsic sign via parity-of-negatives (no divide, no prod) ----
        # Exactly equal to prod(sign)/sign_e when all on-edge messages != 0.
        # TODO(synk): exactly-zero messages are treated as positive here; the
        # reference's sign(0)=0 path would instead produce inf/nan.
        neg = (msgs < 0.0).astype(jnp.float32)             # 1 on negative edges
        neg_cnt = sum_over_v(neg)                          # (C, 1, Bt)
        row_sign = 1.0 - 2.0 * (neg_cnt - 2.0 * jnp.floor(neg_cnt * 0.5))
        edge_sign = 1.0 - 2.0 * neg                        # +/-1 (on edges)
        ext_sign = row_sign * edge_sign                    # (C, V, Bt)

        msg_c2v = -phi_ext * ext_sign                      # (C, V, Bt), 0 off-edge

        # ---- variable-node update: total LLR (sum over check nodes) ----
        acc = msg_c2v[0]
        for c in range(1, C):
            acc = acc + msg_c2v[c]
        llr_tot = llr + acc                                # (V, Bt)

        # ---- hard decision + per-codeword syndrome (emulates the `break`) ---
        # TODO(synk): hard_decision() is undefined in the reference file;
        # standard LLR convention used: bit = 1 iff llr < 0.
        est = (llr_tot < 0.0).astype(jnp.float32)          # (V, Bt)
        syn = sum_over_v(Hb * est[None, :, :])             # (C, 1, Bt)
        syn = syn - 2.0 * jnp.floor(syn * 0.5)             # mod 2
        syn_tot = syn[0]
        for c in range(1, C):
            syn_tot = syn_tot + syn[c]
        conv = (syn_tot == 0.0).astype(jnp.float32)        # (1, Bt)

        msgs_new = Hb * llr_tot[None, :, :] - msg_c2v      # (C, V, Bt), 0 off-edge

        # ---- replicate the python `break` per codeword (per lane) ----
        freeze = jnp.maximum(done, conv)                   # (1, Bt)
        llr_out = jnp.where(done > 0.5, llr_tot_prev, llr_tot)
        msgs_out = jnp.where(freeze[None, :, :] > 0.5, msgs, msgs_new)
        return llr_out, msgs_out, freeze

    init = (jnp.zeros((V, Bt), jnp.float32),
            Hb * llr_b,                 # iteration-0 v->c messages (== H * llr)
            jnp.zeros((1, Bt), jnp.float32))
    # TODO(synk): an "all lanes in this tile converged" early exit
    # (lax.while_loop on a lane-reduced scalar) would skip remaining iterations
    # entirely; kept as a statically-unrolled fori_loop for robust lowering --
    # converged lanes are simply frozen, which is numerically identical.
    llr_tot, _, _ = lax.fori_loop(0, max_iters, body, init, unroll=True)
    out_ref[...] = llr_tot              # lane-dense store (last dim = Bt)


def _round_up(x, m):
    return ((x + m - 1) // m) * m


def ldpc_belief_propagation(llr, H, max_iters, b_tile=1024):
    """llr: (B, 1, V) float32, H: (1, C, V) in {0,1}. Returns llr_total (B, 1, V)."""
    assert max_iters >= 1
    B, one, V = llr.shape
    assert one == 1
    C = H.shape[-2]
    assert H.shape[-1] == V

    # Batch-on-lanes relayout so every VPU/EUP op is lane-dense.
    b_tile = max(128, min(_round_up(int(b_tile), 128), _round_up(B, 128)))
    B_pad = _round_up(B, b_tile)
    llr_t = jnp.transpose(llr.astype(jnp.float32).reshape(B, V))      # (V, B)
    # Pad lanes with +1.0 LLRs (valid all-zero codewords; converge instantly).
    llr_t = jnp.pad(llr_t, ((0, 0), (0, B_pad - B)), constant_values=1.0)
    Hk = jnp.asarray(H, jnp.float32).reshape(C, V, 1)   # lane-broadcast layout

    kernel = functools.partial(_ldpc_bp_kernel, max_iters=int(max_iters))
    out_t = pl.pallas_call(
        kernel,
        out_shape=jax.ShapeDtypeStruct((V, B_pad), jnp.float32),
        grid=(B_pad // b_tile,),
        in_specs=[
            pl.BlockSpec((V, b_tile), lambda g: (0, g)),   # LLRs, batch on lanes
            pl.BlockSpec((C, V, 1), lambda g: (0, 0, 0)),  # shared parity-check H
        ],
        out_specs=pl.BlockSpec((V, b_tile), lambda g: (0, g)),
        compiler_params=pltpu.CompilerParams(
            dimension_semantics=("parallel",)),   # megacore / v7x 2-TC sharding
    )(llr_t, Hk)
    return jnp.transpose(out_t[:, :B]).reshape(B, 1, V)


def _ref_single(llr_1v, H_cv, max_iters):
    """NumPy mirror of the PyTorch forward for one sample (B=1 semantics)."""
    H = H_cv.astype(np.float32)
    llr = llr_1v.astype(np.float32)

    def phi(x):
        t = np.tanh(x / 2.0)
        return np.where(H == 1.0, np.log(np.abs(t)), np.float32(0.0))

    msgs = np.zeros_like(H * llr)
    llr_total = None
    for it in range(max_iters):
        llr_update = H * llr if it == 0 else msgs
        log_llr_update = phi(llr_update)
        sum_log_llr = np.sum(log_llr_update, axis=1, keepdims=True)
        masked_sum_log_llr = H * sum_log_llr
        sum_log_llr_update = masked_sum_log_llr - log_llr_update
        phi_sum = phi(sum_log_llr_update)
        sign0 = np.sign(llr_update)
        masked_sign = sign0 * H
        masked_sign_ones = masked_sign + (1.0 - H)
        sign = np.prod(masked_sign_ones, axis=1, keepdims=True)
        sign_mask = H * sign
        sign_mask_update = sign_mask / masked_sign_ones
        messages_c_to_v = -phi_sum * sign_mask_update
        sum_msgs = np.sum(messages_c_to_v, axis=0, keepdims=True)
        llr_total = llr + sum_msgs
        est = (llr_total < 0).astype(np.float32)
        mult = (est @ H.T) % 2
        if np.all(mult == 0):
            break
        msgs = H * llr_total - messages_c_to_v
    return llr_total


if __name__ == "__main__":
    # Hamming(7,4) parity-check matrix: C = 3 check nodes, V = 7 variable nodes.
    H_np = np.array([[1, 0, 1, 0, 1, 0, 1],
                     [0, 1, 1, 0, 0, 1, 1],
                     [0, 0, 0, 1, 1, 1, 1]], dtype=np.float32)[None, :, :]  # (1,3,7)
    H = jnp.asarray(H_np)

    B, C, V = 2, H_np.shape[1], H_np.shape[2]
    key = jax.random.PRNGKey(0)
    llr = 2.0 * jax.random.normal(key, (B, 1, V), dtype=jnp.float32)
    max_iters = 5

    out = ldpc_belief_propagation(llr, H, max_iters)
    out = jax.block_until_ready(out)

    # Cross-check against a NumPy mirror of the PyTorch forward (per sample).
    llr_np = np.asarray(llr)
    ref = np.stack([_ref_single(llr_np[b], H_np[0], max_iters) for b in range(B)],
                   axis=0)
    np.testing.assert_allclose(np.asarray(out), ref, rtol=1e-3, atol=1e-3)

    print("KERNEL_OK")
</pallas_src>

<mosaic_0001>
module attributes {stable_mosaic.version = 11 : i64} {
  func.func @_ldpc_bp_kernel(%arg0: i32, %arg1: memref<7x128xf32, #tpu.memory_space<vmem>>, %arg2: memref<3x7x1xf32, #tpu.memory_space<vmem>>, %arg3: memref<7x128xf32, #tpu.memory_space<vmem>>) attributes {dimension_semantics = [#tpu.dimension_semantics<parallel>], iteration_bounds = array<i64: 1>, scalar_prefetch = 0 : i64, scratch_operands = 0 : i64, tpu.core_type = #tpu.core_type<tc>, window_params = [{transform_indices = @transform_0, window_bounds = array<i64: 7, 128>}, {pipeline_mode = #tpu.pipeline_mode<synchronous>, transform_indices = @transform_1, window_bounds = array<i64: 3, 7, 1>}, {transform_indices = @transform_2, window_bounds = array<i64: 7, 128>}]} {
    %c0 = arith.constant 0 : index
    %c0_0 = arith.constant 0 : index
    %c0_1 = arith.constant 0 : index
    %0 = vector.load %arg2[%c0, %c0_0, %c0_1] : memref<3x7x1xf32, #tpu.memory_space<vmem>>, vector<3x7x1xf32>
    %1 = vector.shape_cast %0 : vector<3x7x1xf32> to vector<3x7x1xf32>
    %2 = vector.broadcast %1 : vector<3x7x1xf32> to vector<3x7x128xf32>
    %cst = arith.constant 1.000000e+00 : f32
    %3 = vector.broadcast %cst : f32 to vector<3x7x128xf32>
    %4 = arith.cmpf oeq, %2, %3 : vector<3x7x128xf32>
    %c0_2 = arith.constant 0 : index
    %c0_3 = arith.constant 0 : index
    %5 = vector.load %arg1[%c0_2, %c0_3] : memref<7x128xf32, #tpu.memory_space<vmem>>, vector<7x128xf32>
    %6 = vector.shape_cast %5 : vector<7x128xf32> to vector<1x7x128xf32>
    %cst_4 = arith.constant 0.000000e+00 : f32
    %7 = vector.broadcast %cst_4 : f32 to vector<7x128xf32>
    %8 = vector.broadcast %6 : vector<1x7x128xf32> to vector<3x7x128xf32>
    %9 = arith.mulf %2, %8 : vector<3x7x128xf32>
    %cst_5 = arith.constant 0.000000e+00 : f32
    %10 = vector.broadcast %cst_5 : f32 to vector<1x128xf32>
    %c0_i32 = arith.constant 0 : i32
    %cst_6 = arith.constant 5.000000e-01 : f32
    %11 = vector.broadcast %cst_6 : f32 to vector<3x7x128xf32>
    %12 = arith.mulf %9, %11 : vector<3x7x128xf32>
    %13 = math.tanh %12 : vector<3x7x128xf32>
    %14 = math.absf %13 : vector<3x7x128xf32>
    %15 = math.log %14 : vector<3x7x128xf32>
    %cst_7 = arith.constant 0.000000e+00 : f32
    %16 = vector.broadcast %cst_7 : f32 to vector<3x7x128xf32>
    %17 = arith.select %4, %15, %16 : vector<3x7x128xi1>, vector<3x7x128xf32>
    %18 = vector.extract_strided_slice %17 {offsets = [0, 0, 0], sizes = [3, 1, 128], strides = [1, 1, 1]} : vector<3x7x128xf32> to vector<3x1x128xf32>
    %19 = vector.extract_strided_slice %17 {offsets = [0, 1, 0], sizes = [3, 1, 128], strides = [1, 1, 1]} : vector<3x7x128xf32> to vector<3x1x128xf32>
    %20 = arith.addf %18, %19 : vector<3x1x128xf32>
    %21 = vector.extract_strided_slice %17 {offsets = [0, 2, 0], sizes = [3, 1, 128], strides = [1, 1, 1]} : vector<3x7x128xf32> to vector<3x1x128xf32>
    %22 = arith.addf %20, %21 : vector<3x1x128xf32>
    %23 = vector.extract_strided_slice %17 {offsets = [0, 3, 0], sizes = [3, 1, 128], strides = [1, 1, 1]} : vector<3x7x128xf32> to vector<3x1x128xf32>
    %24 = arith.addf %22, %23 : vector<3x1x128xf32>
    %25 = vector.extract_strided_slice %17 {offsets = [0, 4, 0], sizes = [3, 1, 128], strides = [1, 1, 1]} : vector<3x7x128xf32> to vector<3x1x128xf32>
    %26 = arith.addf %24, %25 : vector<3x1x128xf32>
    %27 = vector.extract_strided_slice %17 {offsets = [0, 5, 0], sizes = [3, 1, 128], strides = [1, 1, 1]} : vector<3x7x128xf32> to vector<3x1x128xf32>
    %28 = arith.addf %26, %27 : vector<3x1x128xf32>
    %29 = vector.extract_strided_slice %17 {offsets = [0, 6, 0], sizes = [3, 1, 128], strides = [1, 1, 1]} : vector<3x7x128xf32> to vector<3x1x128xf32>
    %30 = arith.addf %28, %29 : vector<3x1x128xf32>
    %31 = vector.broadcast %30 : vector<3x1x128xf32> to vector<3x7x128xf32>
    %32 = arith.subf %31, %17 : vector<3x7x128xf32>
    %cst_8 = arith.constant 5.000000e-01 : f32
    %33 = vector.broadcast %cst_8 : f32 to vector<3x7x128xf32>
    %34 = arith.mulf %32, %33 : vector<3x7x128xf32>
    %35 = math.tanh %34 : vector<3x7x128xf32>
    %36 = math.absf %35 : vector<3x7x128xf32>
    %37 = math.log %36 : vector<3x7x128xf32>
    %cst_9 = arith.constant 0.000000e+00 : f32
    %38 = vector.broadcast %cst_9 : f32 to vector<3x7x128xf32>
    %39 = arith.select %4, %37, %38 : vector<3x7x128xi1>, vector<3x7x128xf32>
    %cst_10 = arith.constant 0.000000e+00 : f32
    %40 = vector.broadcast %cst_10 : f32 to vector<3x7x128xf32>
    %41 = arith.cmpf olt, %9, %40 : vector<3x7x128xf32>
    %42 = arith.extui %41 : vector<3x7x128xi1> to vector<3x7x128xi32>
    %43 = arith.sitofp %42 : vector<3x7x128xi32> to vector<3x7x128xf32>
    %44 = vector.extract_strided_slice %43 {offsets = [0, 0, 0], sizes = [3, 1, 128], strides = [1, 1, 1]} : vector<3x7x128xf32> to vector<3x1x128xf32>
    %45 = vector.extract_strided_slice %43 {offsets = [0, 1, 0], sizes = [3, 1, 128], strides = [1, 1, 1]} : vector<3x7x128xf32> to vector<3x1x128xf32>
    %46 = arith.addf %44, %45 : vector<3x1x128xf32>
    %47 = vector.extract_strided_slice %43 {offsets = [0, 2, 0], sizes = [3, 1, 128], strides = [1, 1, 1]} : vector<3x7x128xf32> to vector<3x1x128xf32>
    %48 = arith.addf %46, %47 : vector<3x1x128xf32>
    %49 = vector.extract_strided_slice %43 {offsets = [0, 3, 0], sizes = [3, 1, 128], strides = [1, 1, 1]} : vector<3x7x128xf32> to vector<3x1x128xf32>
    %50 = arith.addf %48, %49 : vector<3x1x128xf32>
    %51 = vector.extract_strided_slice %43 {offsets = [0, 4, 0], sizes = [3, 1, 128], strides = [1, 1, 1]} : vector<3x7x128xf32> to vector<3x1x128xf32>
    %52 = arith.addf %50, %51 : vector<3x1x128xf32>
    %53 = vector.extract_strided_slice %43 {offsets = [0, 5, 0], sizes = [3, 1, 128], strides = [1, 1, 1]} : vector<3x7x128xf32> to vector<3x1x128xf32>
    %54 = arith.addf %52, %53 : vector<3x1x128xf32>
    %55 = vector.extract_strided_slice %43 {offsets = [0, 6, 0], sizes = [3, 1, 128], strides = [1, 1, 1]} : vector<3x7x128xf32> to vector<3x1x128xf32>
    %56 = arith.addf %54, %55 : vector<3x1x128xf32>
    %cst_11 = arith.constant 5.000000e-01 : f32
    %57 = vector.broadcast %cst_11 : f32 to vector<3x1x128xf32>
    %58 = arith.mulf %56, %57 : vector<3x1x128xf32>
    %59 = math.floor %58 : vector<3x1x128xf32>
    %cst_12 = arith.constant 2.000000e+00 : f32
    %60 = vector.broadcast %cst_12 : f32 to vector<3x1x128xf32>
    %61 = arith.mulf %60, %59 : vector<3x1x128xf32>
    %62 = arith.subf %56, %61 : vector<3x1x128xf32>
    %cst_13 = arith.constant 2.000000e+00 : f32
    %63 = vector.broadcast %cst_13 : f32 to vector<3x1x128xf32>
    %64 = arith.mulf %63, %62 : vector<3x1x128xf32>
    %cst_14 = arith.constant 1.000000e+00 : f32
    %65 = vector.broadcast %cst_14 : f32 to vector<3x1x128xf32>
    %66 = arith.subf %65, %64 : vector<3x1x128xf32>
    %cst_15 = arith.constant 2.000000e+00 : f32
    %67 = vector.broadcast %cst_15 : f32 to vector<3x7x128xf32>
    %68 = arith.mulf %67, %43 : vector<3x7x128xf32>
    %cst_16 = arith.constant 1.000000e+00 : f32
    %69 = vector.broadcast %cst_16 : f32 to vector<3x7x128xf32>
    %70 = arith.subf %69, %68 : vector<3x7x128xf32>
    %71 = vector.broadcast %66 : vector<3x1x128xf32> to vector<3x7x128xf32>
    %72 = arith.mulf %71, %70 : vector<3x7x128xf32>
    %cst_17 = arith.constant 0.000000e+00 : f32
    %73 = vector.broadcast %cst_17 : f32 to vector<3x7x128xf32>
    %74 = arith.subf %73, %39 : vector<3x7x128xf32>
    %75 = arith.mulf %74, %72 : vector<3x7x128xf32>
    %76 = vector.extract_strided_slice %75 {offsets = [0, 0, 0], sizes = [1, 7, 128], strides = [1, 1, 1]} : vector<3x7x128xf32> to vector<1x7x128xf32>
    %77 = vector.shape_cast %76 : vector<1x7x128xf32> to vector<7x128xf32>
    %78 = vector.extract_strided_slice %75 {offsets = [1, 0, 0], sizes = [1, 7, 128], strides = [1, 1, 1]} : vector<3x7x128xf32> to vector<1x7x128xf32>
    %79 = vector.shape_cast %78 : vector<1x7x128xf32> to vector<7x128xf32>
    %80 = arith.addf %77, %79 : vector<7x128xf32>
    %81 = vector.extract_strided_slice %75 {offsets = [2, 0, 0], sizes = [1, 7, 128], strides = [1, 1, 1]} : vector<3x7x128xf32> to vector<1x7x128xf32>
    %82 = vector.shape_cast %81 : vector<1x7x128xf32> to vector<7x128xf32>
    %83 = arith.addf %80, %82 : vector<7x128xf32>
    %84 = arith.addf %5, %83 : vector<7x128xf32>
    %cst_18 = arith.constant 0.000000e+00 : f32
    %85 = vector.broadcast %cst_18 : f32 to vector<7x128xf32>
    %86 = arith.cmpf olt, %84, %85 : vector<7x128xf32>
    %87 = arith.extui %86 : vector<7x128xi1> to vector<7x128xi32>
    %88 = arith.sitofp %87 : vector<7x128xi32> to vector<7x128xf32>
    %89 = vector.shape_cast %88 : vector<7x128xf32> to vector<1x7x128xf32>
    %90 = vector.broadcast %89 : vector<1x7x128xf32> to vector<3x7x128xf32>
    %91 = arith.mulf %2, %90 : vector<3x7x128xf32>
    %92 = vector.extract_strided_slice %91 {offsets = [0, 0, 0], sizes = [3, 1, 128], strides = [1, 1, 1]} : vector<3x7x128xf32> to vector<3x1x128xf32>
    %93 = vector.extract_strided_slice %91 {offsets = [0, 1, 0], sizes = [3, 1, 128], strides = [1, 1, 1]} : vector<3x7x128xf32> to vector<3x1x128xf32>
    %94 = arith.addf %92, %93 : vector<3x1x128xf32>
    %95 = vector.extract_strided_slice %91 {offsets = [0, 2, 0], sizes = [3, 1, 128], strides = [1, 1, 1]} : vector<3x7x128xf32> to vector<3x1x128xf32>
    %96 = arith.addf %94, %95 : vector<3x1x128xf32>
    %97 = vector.extract_strided_slice %91 {offsets = [0, 3, 0], sizes = [3, 1, 128], strides = [1, 1, 1]} : vector<3x7x128xf32> to vector<3x1x128xf32>
    %98 = arith.addf %96, %97 : vector<3x1x128xf32>
    %99 = vector.extract_strided_slice %91 {offsets = [0, 4, 0], sizes = [3, 1, 128], strides = [1, 1, 1]} : vector<3x7x128xf32> to vector<3x1x128xf32>
    %100 = arith.addf %98, %99 : vector<3x1x128xf32>
    %101 = vector.extract_strided_slice %91 {offsets = [0, 5, 0], sizes = [3, 1, 128], strides = [1, 1, 1]} : vector<3x7x128xf32> to vector<3x1x128xf32>
    %102 = arith.addf %100, %101 : vector<3x1x128xf32>
    %103 = vector.extract_strided_slice %91 {offsets = [0, 6, 0], sizes = [3, 1, 128], strides = [1, 1, 1]} : vector<3x7x128xf32> to vector<3x1x128xf32>
    %104 = arith.addf %102, %103 : vector<3x1x128xf32>
    %cst_19 = arith.constant 5.000000e-01 : f32
    %105 = vector.broadcast %cst_19 : f32 to vector<3x1x128xf32>
    %106 = arith.mulf %104, %105 : vector<3x1x128xf32>
    %107 = math.floor %106 : vector<3x1x128xf32>
    %cst_20 = arith.constant 2.000000e+00 : f32
    %108 = vector.broadcast %cst_20 : f32 to vector<3x1x128xf32>
    %109 = arith.mulf %108, %107 : vector<3x1x128xf32>
    %110 = arith.subf %104, %109 : vector<3x1x128xf32>
    %111 = vector.extract_strided_slice %110 {offsets = [0, 0, 0], sizes = [1, 1, 128], strides = [1, 1, 1]} : vector<3x1x128xf32> to vector<1x1x128xf32>
    %112 = vector.shape_cast %111 : vector<1x1x128xf32> to vector<1x128xf32>
    %113 = vector.extract_strided_slice %110 {offsets = [1, 0, 0], sizes = [1, 1, 128], strides = [1, 1, 1]} : vector<3x1x128xf32> to vector<1x1x128xf32>
    %114 = vector.shape_cast %113 : vector<1x1x128xf32> to vector<1x128xf32>
    %115 = arith.addf %112, %114 : vector<1x128xf32>
    %116 = vector.extract_strided_slice %110 {offsets = [2, 0, 0], sizes = [1, 1, 128], strides = [1, 1, 1]} : vector<3x1x128xf32> to vector<1x1x128xf32>
    %117 = vector.shape_cast %116 : vector<1x1x128xf32> to vector<1x128xf32>
    %118 = arith.addf %115, %117 : vector<1x128xf32>
    %cst_21 = arith.constant 0.000000e+00 : f32
    %119 = vector.broadcast %cst_21 : f32 to vector<1x128xf32>
    %120 = arith.cmpf oeq, %118, %119 : vector<1x128xf32>
    %121 = arith.extui %120 : vector<1x128xi1> to vector<1x128xi32>
    %122 = arith.sitofp %121 : vector<1x128xi32> to vector<1x128xf32>
    %123 = vector.shape_cast %84 : vector<7x128xf32> to vector<1x7x128xf32>
    %124 = vector.broadcast %123 : vector<1x7x128xf32> to vector<3x7x128xf32>
    %125 = arith.mulf %2, %124 : vector<3x7x128xf32>
    %126 = arith.subf %125, %75 : vector<3x7x128xf32>
    %127 = arith.maximumf %10, %122 : vector<1x128xf32>
    %cst_22 = arith.constant 5.000000e-01 : f32
    %128 = vector.broadcast %cst_22 : f32 to vector<1x128xf32>
    %129 = arith.cmpf ogt, %10, %128 : vector<1x128xf32>
    %130 = vector.shape_cast %129 : vector<1x128xi1> to vector<1x128xi1>
    %131 = vector.broadcast %130 : vector<1x128xi1> to vector<7x128xi1>
    %132 = arith.select %131, %7, %84 : vector<7x128xi1>, vector<7x128xf32>
    %133 = vector.shape_cast %127 : vector<1x128xf32> to vector<1x1x128xf32>
    %cst_23 = arith.constant 5.000000e-01 : f32
    %134 = vector.broadcast %cst_23 : f32 to vector<1x1x128xf32>
    %135 = arith.cmpf ogt, %133, %134 : vector<1x1x128xf32>
    %136 = vector.shape_cast %135 : vector<1x1x128xi1> to vector<1x1x128xi1>
    %137 = vector.broadcast %136 : vector<1x1x128xi1> to vector<3x7x128xi1>
    %138 = arith.select %137, %9, %126 : vector<3x7x128xi1>, vector<3x7x128xf32>
    %c1_i32 = arith.constant 1 : i32
    %cst_24 = arith.constant 5.000000e-01 : f32
    %139 = vector.broadcast %cst_24 : f32 to vector<3x7x128xf32>
    %140 = arith.mulf %138, %139 : vector<3x7x128xf32>
    %141 = math.tanh %140 : vector<3x7x128xf32>
    %142 = math.absf %141 : vector<3x7x128xf32>
    %143 = math.log %142 : vector<3x7x128xf32>
    %cst_25 = arith.constant 0.000000e+00 : f32
    %144 = vector.broadcast %cst_25 : f32 to vector<3x7x128xf32>
    %145 = arith.select %4, %143, %144 : vector<3x7x128xi1>, vector<3x7x128xf32>
    %146 = vector.extract_strided_slice %145 {offsets = [0, 0, 0], sizes = [3, 1, 128], strides = [1, 1, 1]} : vector<3x7x128xf32> to vector<3x1x128xf32>
    %147 = vector.extract_strided_slice %145 {offsets = [0, 1, 0], sizes = [3, 1, 128], strides = [1, 1, 1]} : vector<3x7x128xf32> to vector<3x1x128xf32>
    %148 = arith.addf %146, %147 : vector<3x1x128xf32>
    %149 = vector.extract_strided_slice %145 {offsets = [0, 2, 0], sizes = [3, 1, 128], strides = [1, 1, 1]} : vector<3x7x128xf32> to vector<3x1x128xf32>
    %150 = arith.addf %148, %149 : vector<3x1x128xf32>
    %151 = vector.extract_strided_slice %145 {offsets = [0, 3, 0], sizes = [3, 1, 128], strides = [1, 1, 1]} : vector<3x7x128xf32> to vector<3x1x128xf32>
    %152 = arith.addf %150, %151 : vector<3x1x128xf32>
    %153 = vector.extract_strided_slice %145 {offsets = [0, 4, 0], sizes = [3, 1, 128], strides = [1, 1, 1]} : vector<3x7x128xf32> to vector<3x1x128xf32>
    %154 = arith.addf %152, %153 : vector<3x1x128xf32>
    %155 = vector.extract_strided_slice %145 {offsets = [0, 5, 0], sizes = [3, 1, 128], strides = [1, 1, 1]} : vector<3x7x128xf32> to vector<3x1x128xf32>
    %156 = arith.addf %154, %155 : vector<3x1x128xf32>
    %157 = vector.extract_strided_slice %145 {offsets = [0, 6, 0], sizes = [3, 1, 128], strides = [1, 1, 1]} : vector<3x7x128xf32> to vector<3x1x128xf32>
    %158 = arith.addf %156, %157 : vector<3x1x128xf32>
    %159 = vector.broadcast %158 : vector<3x1x128xf32> to vector<3x7x128xf32>
    %160 = arith.subf %159, %145 : vector<3x7x128xf32>
    %cst_26 = arith.constant 5.000000e-01 : f32
    %161 = vector.broadcast %cst_26 : f32 to vector<3x7x128xf32>
    %162 = arith.mulf %160, %161 : vector<3x7x128xf32>
    %163 = math.tanh %162 : vector<3x7x128xf32>
    %164 = math.absf %163 : vector<3x7x128xf32>
    %165 = math.log %164 : vector<3x7x128xf32>
    %cst_27 = arith.constant 0.000000e+00 : f32
    %166 = vector.broadcast %cst_27 : f32 to vector<3x7x128xf32>
    %167 = arith.select %4, %165, %166 : vector<3x7x128xi1>, vector<3x7x128xf32>
    %cst_28 = arith.constant 0.000000e+00 : f32
    %168 = vector.broadcast %cst_28 : f32 to vector<3x7x128xf32>
    %169 = arith.cmpf olt, %138, %168 : vector<3x7x128xf32>
    %170 = arith.extui %169 : vector<3x7x128xi1> to vector<3x7x128xi32>
    %171 = arith.sitofp %170 : vector<3x7x128xi32> to vector<3x7x128xf32>
    %172 = vector.extract_strided_slice %171 {offsets = [0, 0, 0], sizes = [3, 1, 128], strides = [1, 1, 1]} : vector<3x7x128xf32> to vector<3x1x128xf32>
    %173 = vector.extract_strided_slice %171 {offsets = [0, 1, 0], sizes = [3, 1, 128], strides = [1, 1, 1]} : vector<3x7x128xf32> to vector<3x1x128xf32>
    %174 = arith.addf %172, %173 : vector<3x1x128xf32>
    %175 = vector.extract_strided_slice %171 {offsets = [0, 2, 0], sizes = [3, 1, 128], strides = [1, 1, 1]} : vector<3x7x128xf32> to vector<3x1x128xf32>
    %176 = arith.addf %174, %175 : vector<3x1x128xf32>
    %177 = vector.extract_strided_slice %171 {offsets = [0, 3, 0], sizes = [3, 1, 128], strides = [1, 1, 1]} : vector<3x7x128xf32> to vector<3x1x128xf32>
    %178 = arith.addf %176, %177 : vector<3x1x128xf32>
    %179 = vector.extract_strided_slice %171 {offsets = [0, 4, 0], sizes = [3, 1, 128], strides = [1, 1, 1]} : vector<3x7x128xf32> to vector<3x1x128xf32>
    %180 = arith.addf %178, %179 : vector<3x1x128xf32>
    %181 = vector.extract_strided_slice %171 {offsets = [0, 5, 0], sizes = [3, 1, 128], strides = [1, 1, 1]} : vector<3x7x128xf32> to vector<3x1x128xf32>
    %182 = arith.addf %180, %181 : vector<3x1x128xf32>
    %183 = vector.extract_strided_slice %171 {offsets = [0, 6, 0], sizes = [3, 1, 128], strides = [1, 1, 1]} : vector<3x7x128xf32> to vector<3x1x128xf32>
    %184 = arith.addf %182, %183 : vector<3x1x128xf32>
    %cst_29 = arith.constant 5.000000e-01 : f32
    %185 = vector.broadcast %cst_29 : f32 to vector<3x1x128xf32>
    %186 = arith.mulf %184, %185 : vector<3x1x128xf32>
    %187 = math.floor %186 : vector<3x1x128xf32>
    %cst_30 = arith.constant 2.000000e+00 : f32
    %188 = vector.broadcast %cst_30 : f32 to vector<3x1x128xf32>
    %189 = arith.mulf %188, %187 : vector<3x1x128xf32>
    %190 = arith.subf %184, %189 : vector<3x1x128xf32>
    %cst_31 = arith.constant 2.000000e+00 : f32
    %191 = vector.broadcast %cst_31 : f32 to vector<3x1x128xf32>
    %192 = arith.mulf %191, %190 : vector<3x1x128xf32>
    %cst_32 = arith.constant 1.000000e+00 : f32
    %193 = vector.broadcast %cst_32 : f32 to vector<3x1x128xf32>
    %194 = arith.subf %193, %192 : vector<3x1x128xf32>
    %cst_33 = arith.constant 2.000000e+00 : f32
    %195 = vector.broadcast %cst_33 : f32 to vector<3x7x128xf32>
    %196 = arith.mulf %195, %171 : vector<3x7x128xf32>
    %cst_34 = arith.constant 1.000000e+00 : f32
    %197 = vector.broadcast %cst_34 : f32 to vector<3x7x128xf32>
    %198 = arith.subf %197, %196 : vector<3x7x128xf32>
    %199 = vector.broadcast %194 : vector<3x1x128xf32> to vector<3x7x128xf32>
    %200 = arith.mulf %199, %198 : vector<3x7x128xf32>
    %cst_35 = arith.constant 0.000000e+00 : f32
    %201 = vector.broadcast %cst_35 : f32 to vector<3x7x128xf32>
    %202 = arith.subf %201, %167 : vector<3x7x128xf32>
    %203 = arith.mulf %202, %200 : vector<3x7x128xf32>
    %204 = vector.extract_strided_slice %203 {offsets = [0, 0, 0], sizes = [1, 7, 128], strides = [1, 1, 1]} : vector<3x7x128xf32> to vector<1x7x128xf32>
    %205 = vector.shape_cast %204 : vector<1x7x128xf32> to vector<7x128xf32>
    %206 = vector.extract_strided_slice %203 {offsets = [1, 0, 0], sizes = [1, 7, 128], strides = [1, 1, 1]} : vector<3x7x128xf32> to vector<1x7x128xf32>
    %207 = vector.shape_cast %206 : vector<1x7x128xf32> to vector<7x128xf32>
    %208 = arith.addf %205, %207 : vector<7x128xf32>
    %209 = vector.extract_strided_slice %203 {offsets = [2, 0, 0], sizes = [1, 7, 128], strides = [1, 1, 1]} : vector<3x7x128xf32> to vector<1x7x128xf32>
    %210 = vector.shape_cast %209 : vector<1x7x128xf32> to vector<7x128xf32>
    %211 = arith.addf %208, %210 : vector<7x128xf32>
    %212 = arith.addf %5, %211 : vector<7x128xf32>
    %cst_36 = arith.constant 0.000000e+00 : f32
    %213 = vector.broadcast %cst_36 : f32 to vector<7x128xf32>
    %214 = arith.cmpf olt, %212, %213 : vector<7x128xf32>
    %215 = arith.extui %214 : vector<7x128xi1> to vector<7x128xi32>
    %216 = arith.sitofp %215 : vector<7x128xi32> to vector<7x128xf32>
    %217 = vector.shape_cast %216 : vector<7x128xf32> to vector<1x7x128xf32>
    %218 = vector.broadcast %217 : vector<1x7x128xf32> to vector<3x7x128xf32>
    %219 = arith.mulf %2, %218 : vector<3x7x128xf32>
    %220 = vector.extract_strided_slice %219 {offsets = [0, 0, 0], sizes = [3, 1, 128], strides = [1, 1, 1]} : vector<3x7x128xf32> to vector<3x1x128xf32>
    %221 = vector.extract_strided_slice %219 {offsets = [0, 1, 0], sizes = [3, 1, 128], strides = [1, 1, 1]} : vector<3x7x128xf32> to vector<3x1x128xf32>
    %222 = arith.addf %220, %221 : vector<3x1x128xf32>
    %223 = vector.extract_strided_slice %219 {offsets = [0, 2, 0], sizes = [3, 1, 128], strides = [1, 1, 1]} : vector<3x7x128xf32> to vector<3x1x128xf32>
    %224 = arith.addf %222, %223 : vector<3x1x128xf32>
    %225 = vector.extract_strided_slice %219 {offsets = [0, 3, 0], sizes = [3, 1, 128], strides = [1, 1, 1]} : vector<3x7x128xf32> to vector<3x1x128xf32>
    %226 = arith.addf %224, %225 : vector<3x1x128xf32>
    %227 = vector.extract_strided_slice %219 {offsets = [0, 4, 0], sizes = [3, 1, 128], strides = [1, 1, 1]} : vector<3x7x128xf32> to vector<3x1x128xf32>
    %228 = arith.addf %226, %227 : vector<3x1x128xf32>
    %229 = vector.extract_strided_slice %219 {offsets = [0, 5, 0], sizes = [3, 1, 128], strides = [1, 1, 1]} : vector<3x7x128xf32> to vector<3x1x128xf32>
    %230 = arith.addf %228, %229 : vector<3x1x128xf32>
    %231 = vector.extract_strided_slice %219 {offsets = [0, 6, 0], sizes = [3, 1, 128], strides = [1, 1, 1]} : vector<3x7x128xf32> to vector<3x1x128xf32>
    %232 = arith.addf %230, %231 : vector<3x1x128xf32>
    %cst_37 = arith.constant 5.000000e-01 : f32
    %233 = vector.broadcast %cst_37 : f32 to vector<3x1x128xf32>
    %234 = arith.mulf %232, %233 : vector<3x1x128xf32>
    %235 = math.floor %234 : vector<3x1x128xf32>
    %cst_38 = arith.constant 2.000000e+00 : f32
    %236 = vector.broadcast %cst_38 : f32 to vector<3x1x128xf32>
    %237 = arith.mulf %236, %235 : vector<3x1x128xf32>
    %238 = arith.subf %232, %237 : vector<3x1x128xf32>
    %239 = vector.extract_strided_slice %238 {offsets = [0, 0, 0], sizes = [1, 1, 128], strides = [1, 1, 1]} : vector<3x1x128xf32> to vector<1x1x128xf32>
    %240 = vector.shape_cast %239 : vector<1x1x128xf32> to vector<1x128xf32>
    %241 = vector.extract_strided_slice %238 {offsets = [1, 0, 0], sizes = [1, 1, 128], strides = [1, 1, 1]} : vector<3x1x128xf32> to vector<1x1x128xf32>
    %242 = vector.shape_cast %241 : vector<1x1x128xf32> to vector<1x128xf32>
    %243 = arith.addf %240, %242 : vector<1x128xf32>
    %244 = vector.extract_strided_slice %238 {offsets = [2, 0, 0], sizes = [1, 1, 128], strides = [1, 1, 1]} : vector<3x1x128xf32> to vector<1x1x128xf32>
    %245 = vector.shape_cast %244 : vector<1x1x128xf32> to vector<1x128xf32>
    %246 = arith.addf %243, %245 : vector<1x128xf32>
    %cst_39 = arith.constant 0.000000e+00 : f32
    %247 = vector.broadcast %cst_39 : f32 to vector<1x128xf32>
    %248 = arith.cmpf oeq, %246, %247 : vector<1x128xf32>
    %249 = arith.extui %248 : vector<1x128xi1> to vector<1x128xi32>
    %250 = arith.sitofp %249 : vector<1x128xi32> to vector<1x128xf32>
    %251 = vector.shape_cast %212 : vector<7x128xf32> to vector<1x7x128xf32>
    %252 = vector.broadcast %251 : vector<1x7x128xf32> to vector<3x7x128xf32>
    %253 = arith.mulf %2, %252 : vector<3x7x128xf32>
    %254 = arith.subf %253, %203 : vector<3x7x128xf32>
    %255 = arith.maximumf %127, %250 : vector<1x128xf32>
    %cst_40 = arith.constant 5.000000e-01 : f32
    %256 = vector.broadcast %cst_40 : f32 to vector<1x128xf32>
    %257 = arith.cmpf ogt, %127, %256 : vector<1x128xf32>
    %258 = vector.shape_cast %257 : vector<1x128xi1> to vector<1x128xi1>
    %259 = vector.broadcast %258 : vector<1x128xi1> to vector<7x128xi1>
    %260 = arith.select %259, %132, %212 : vector<7x128xi1>, vector<7x128xf32>
    %261 = vector.shape_cast %255 : vector<1x128xf32> to vector<1x1x128xf32>
    %cst_41 = arith.constant 5.000000e-01 : f32
    %262 = vector.broadcast %cst_41 : f32 to vector<1x1x128xf32>
    %263 = arith.cmpf ogt, %261, %262 : vector<1x1x128xf32>
    %264 = vector.shape_cast %263 : vector<1x1x128xi1> to vector<1x1x128xi1>
    %265 = vector.broadcast %264 : vector<1x1x128xi1> to vector<3x7x128xi1>
    %266 = arith.select %265, %138, %254 : vector<3x7x128xi1>, vector<3x7x128xf32>
    %c2_i32 = arith.constant 2 : i32
    %cst_42 = arith.constant 5.000000e-01 : f32
    %267 = vector.broadcast %cst_42 : f32 to vector<3x7x128xf32>
    %268 = arith.mulf %266, %267 : vector<3x7x128xf32>
    %269 = math.tanh %268 : vector<3x7x128xf32>
    %270 = math.absf %269 : vector<3x7x128xf32>
    %271 = math.log %270 : vector<3x7x128xf32>
    %cst_43 = arith.constant 0.000000e+00 : f32
    %272 = vector.broadcast %cst_43 : f32 to vector<3x7x128xf32>
    %273 = arith.select %4, %271, %272 : vector<3x7x128xi1>, vector<3x7x128xf32>
    %274 = vector.extract_strided_slice %273 {offsets = [0, 0, 0], sizes = [3, 1, 128], strides = [1, 1, 1]} : vector<3x7x128xf32> to vector<3x1x128xf32>
    %275 = vector.extract_strided_slice %273 {offsets = [0, 1, 0], sizes = [3, 1, 128], strides = [1, 1, 1]} : vector<3x7x128xf32> to vector<3x1x128xf32>
    %276 = arith.addf %274, %275 : vector<3x1x128xf32>
    %277 = vector.extract_strided_slice %273 {offsets = [0, 2, 0], sizes = [3, 1, 128], strides = [1, 1, 1]} : vector<3x7x128xf32> to vector<3x1x128xf32>
    %278 = arith.addf %276, %277 : vector<3x1x128xf32>
    %279 = vector.extract_strided_slice %273 {offsets = [0, 3, 0], sizes = [3, 1, 128], strides = [1, 1, 1]} : vector<3x7x128xf32> to vector<3x1x128xf32>
    %280 = arith.addf %278, %279 : vector<3x1x128xf32>
    %281 = vector.extract_strided_slice %273 {offsets = [0, 4, 0], sizes = [3, 1, 128], strides = [1, 1, 1]} : vector<3x7x128xf32> to vector<3x1x128xf32>
    %282 = arith.addf %280, %281 : vector<3x1x128xf32>
    %283 = vector.extract_strided_slice %273 {offsets = [0, 5, 0], sizes = [3, 1, 128], strides = [1, 1, 1]} : vector<3x7x128xf32> to vector<3x1x128xf32>
    %284 = arith.addf %282, %283 : vector<3x1x128xf32>
    %285 = vector.extract_strided_slice %273 {offsets = [0, 6, 0], sizes = [3, 1, 128], strides = [1, 1, 1]} : vector<3x7x128xf32> to vector<3x1x128xf32>
    %286 = arith.addf %284, %285 : vector<3x1x128xf32>
    %287 = vector.broadcast %286 : vector<3x1x128xf32> to vector<3x7x128xf32>
    %288 = arith.subf %287, %273 : vector<3x7x128xf32>
    %cst_44 = arith.constant 5.000000e-01 : f32
    %289 = vector.broadcast %cst_44 : f32 to vector<3x7x128xf32>
    %290 = arith.mulf %288, %289 : vector<3x7x128xf32>
    %291 = math.tanh %290 : vector<3x7x128xf32>
    %292 = math.absf %291 : vector<3x7x128xf32>
    %293 = math.log %292 : vector<3x7x128xf32>
    %cst_45 = arith.constant 0.000000e+00 : f32
    %294 = vector.broadcast %cst_45 : f32 to vector<3x7x128xf32>
    %295 = arith.select %4, %293, %294 : vector<3x7x128xi1>, vector<3x7x128xf32>
    %cst_46 = arith.constant 0.000000e+00 : f32
    %296 = vector.broadcast %cst_46 : f32 to vector<3x7x128xf32>
    %297 = arith.cmpf olt, %266, %296 : vector<3x7x128xf32>
    %298 = arith.extui %297 : vector<3x7x128xi1> to vector<3x7x128xi32>
    %299 = arith.sitofp %298 : vector<3x7x128xi32> to vector<3x7x128xf32>
    %300 = vector.extract_strided_slice %299 {offsets = [0, 0, 0], sizes = [3, 1, 128], strides = [1, 1, 1]} : vector<3x7x128xf32> to vector<3x1x128xf32>
    %301 = vector.extract_strided_slice %299 {offsets = [0, 1, 0], sizes = [3, 1, 128], strides = [1, 1, 1]} : vector<3x7x128xf32> to vector<3x1x128xf32>
    %302 = arith.addf %300, %301 : vector<3x1x128xf32>
    %303 = vector.extract_strided_slice %299 {offsets = [0, 2, 0], sizes = [3, 1, 128], strides = [1, 1, 1]} : vector<3x7x128xf32> to vector<3x1x128xf32>
    %304 = arith.addf %302, %303 : vector<3x1x128xf32>
    %305 = vector.extract_strided_slice %299 {offsets = [0, 3, 0], sizes = [3, 1, 128], strides = [1, 1, 1]} : vector<3x7x128xf32> to vector<3x1x128xf32>
    %306 = arith.addf %304, %305 : vector<3x1x128xf32>
    %307 = vector.extract_strided_slice %299 {offsets = [0, 4, 0], sizes = [3, 1, 128], strides = [1, 1, 1]} : vector<3x7x128xf32> to vector<3x1x128xf32>
    %308 = arith.addf %306, %307 : vector<3x1x128xf32>
    %309 = vector.extract_strided_slice %299 {offsets = [0, 5, 0], sizes = [3, 1, 128], strides = [1, 1, 1]} : vector<3x7x128xf32> to vector<3x1x128xf32>
    %310 = arith.addf %308, %309 : vector<3x1x128xf32>
    %311 = vector.extract_strided_slice %299 {offsets = [0, 6, 0], sizes = [3, 1, 128], strides = [1, 1, 1]} : vector<3x7x128xf32> to vector<3x1x128xf32>
    %312 = arith.addf %310, %311 : vector<3x1x128xf32>
    %cst_47 = arith.constant 5.000000e-01 : f32
    %313 = vector.broadcast %cst_47 : f32 to vector<3x1x128xf32>
    %314 = arith.mulf %312, %313 : vector<3x1x128xf32>
    %315 = math.floor %314 : vector<3x1x128xf32>
    %cst_48 = arith.constant 2.000000e+00 : f32
    %316 = vector.broadcast %cst_48 : f32 to vector<3x1x128xf32>
    %317 = arith.mulf %316, %315 : vector<3x1x128xf32>
    %318 = arith.subf %312, %317 : vector<3x1x128xf32>
    %cst_49 = arith.constant 2.000000e+00 : f32
    %319 = vector.broadcast %cst_49 : f32 to vector<3x1x128xf32>
    %320 = arith.mulf %319, %318 : vector<3x1x128xf32>
    %cst_50 = arith.constant 1.000000e+00 : f32
    %321 = vector.broadcast %cst_50 : f32 to vector<3x1x128xf32>
    %322 = arith.subf %321, %320 : vector<3x1x128xf32>
    %cst_51 = arith.constant 2.000000e+00 : f32
    %323 = vector.broadcast %cst_51 : f32 to vector<3x7x128xf32>
    %324 = arith.mulf %323, %299 : vector<3x7x128xf32>
    %cst_52 = arith.constant 1.000000e+00 : f32
    %325 = vector.broadcast %cst_52 : f32 to vector<3x7x128xf32>
    %326 = arith.subf %325, %324 : vector<3x7x128xf32>
    %327 = vector.broadcast %322 : vector<3x1x128xf32> to vector<3x7x128xf32>
    %328 = arith.mulf %327, %326 : vector<3x7x128xf32>
    %cst_53 = arith.constant 0.000000e+00 : f32
    %329 = vector.broadcast %cst_53 : f32 to vector<3x7x128xf32>
    %330 = arith.subf %329, %295 : vector<3x7x128xf32>
    %331 = arith.mulf %330, %328 : vector<3x7x128xf32>
    %332 = vector.extract_strided_slice %331 {offsets = [0, 0, 0], sizes = [1, 7, 128], strides = [1, 1, 1]} : vector<3x7x128xf32> to vector<1x7x128xf32>
    %333 = vector.shape_cast %332 : vector<1x7x128xf32> to vector<7x128xf32>
    %334 = vector.extract_strided_slice %331 {offsets = [1, 0, 0], sizes = [1, 7, 128], strides = [1, 1, 1]} : vector<3x7x128xf32> to vector<1x7x128xf32>
    %335 = vector.shape_cast %334 : vector<1x7x128xf32> to vector<7x128xf32>
    %336 = arith.addf %333, %335 : vector<7x128xf32>
    %337 = vector.extract_strided_slice %331 {offsets = [2, 0, 0], sizes = [1, 7, 128], strides = [1, 1, 1]} : vector<3x7x128xf32> to vector<1x7x128xf32>
    %338 = vector.shape_cast %337 : vector<1x7x128xf32> to vector<7x128xf32>
    %339 = arith.addf %336, %338 : vector<7x128xf32>
    %340 = arith.addf %5, %339 : vector<7x128xf32>
    %cst_54 = arith.constant 0.000000e+00 : f32
    %341 = vector.broadcast %cst_54 : f32 to vector<7x128xf32>
    %342 = arith.cmpf olt, %340, %341 : vector<7x128xf32>
    %343 = arith.extui %342 : vector<7x128xi1> to vector<7x128xi32>
    %344 = arith.sitofp %343 : vector<7x128xi32> to vector<7x128xf32>
    %345 = vector.shape_cast %344 : vector<7x128xf32> to vector<1x7x128xf32>
    %346 = vector.broadcast %345 : vector<1x7x128xf32> to vector<3x7x128xf32>
    %347 = arith.mulf %2, %346 : vector<3x7x128xf32>
    %348 = vector.extract_strided_slice %347 {offsets = [0, 0, 0], sizes = [3, 1, 128], strides = [1, 1, 1]} : vector<3x7x128xf32> to vector<3x1x128xf32>
    %349 = vector.extract_strided_slice %347 {offsets = [0, 1, 0], sizes = [3, 1, 128], strides = [1, 1, 1]} : vector<3x7x128xf32> to vector<3x1x128xf32>
    %350 = arith.addf %348, %349 : vector<3x1x128xf32>
    %351 = vector.extract_strided_slice %347 {offsets = [0, 2, 0], sizes = [3, 1, 128], strides = [1, 1, 1]} : vector<3x7x128xf32> to vector<3x1x128xf32>
    %352 = arith.addf %350, %351 : vector<3x1x128xf32>
    %353 = vector.extract_strided_slice %347 {offsets = [0, 3, 0], sizes = [3, 1, 128], strides = [1, 1, 1]} : vector<3x7x128xf32> to vector<3x1x128xf32>
    %354 = arith.addf %352, %353 : vector<3x1x128xf32>
    %355 = vector.extract_strided_slice %347 {offsets = [0, 4, 0], sizes = [3, 1, 128], strides = [1, 1, 1]} : vector<3x7x128xf32> to vector<3x1x128xf32>
    %356 = arith.addf %354, %355 : vector<3x1x128xf32>
    %357 = vector.extract_strided_slice %347 {offsets = [0, 5, 0], sizes = [3, 1, 128], strides = [1, 1, 1]} : vector<3x7x128xf32> to vector<3x1x128xf32>
    %358 = arith.addf %356, %357 : vector<3x1x128xf32>
    %359 = vector.extract_strided_slice %347 {offsets = [0, 6, 0], sizes = [3, 1, 128], strides = [1, 1, 1]} : vector<3x7x128xf32> to vector<3x1x128xf32>
    %360 = arith.addf %358, %359 : vector<3x1x128xf32>
    %cst_55 = arith.constant 5.000000e-01 : f32
    %361 = vector.broadcast %cst_55 : f32 to vector<3x1x128xf32>
    %362 = arith.mulf %360, %361 : vector<3x1x128xf32>
    %363 = math.floor %362 : vector<3x1x128xf32>
    %cst_56 = arith.constant 2.000000e+00 : f32
    %364 = vector.broadcast %cst_56 : f32 to vector<3x1x128xf32>
    %365 = arith.mulf %364, %363 : vector<3x1x128xf32>
    %366 = arith.subf %360, %365 : vector<3x1x128xf32>
    %367 = vector.extract_strided_slice %366 {offsets = [0, 0, 0], sizes = [1, 1, 128], strides = [1, 1, 1]} : vector<3x1x128xf32> to vector<1x1x128xf32>
    %368 = vector.shape_cast %367 : vector<1x1x128xf32> to vector<1x128xf32>
    %369 = vector.extract_strided_slice %366 {offsets = [1, 0, 0], sizes = [1, 1, 128], strides = [1, 1, 1]} : vector<3x1x128xf32> to vector<1x1x128xf32>
    %370 = vector.shape_cast %369 : vector<1x1x128xf32> to vector<1x128xf32>
    %371 = arith.addf %368, %370 : vector<1x128xf32>
    %372 = vector.extract_strided_slice %366 {offsets = [2, 0, 0], sizes = [1, 1, 128], strides = [1, 1, 1]} : vector<3x1x128xf32> to vector<1x1x128xf32>
    %373 = vector.shape_cast %372 : vector<1x1x128xf32> to vector<1x128xf32>
    %374 = arith.addf %371, %373 : vector<1x128xf32>
    %cst_57 = arith.constant 0.000000e+00 : f32
    %375 = vector.broadcast %cst_57 : f32 to vector<1x128xf32>
    %376 = arith.cmpf oeq, %374, %375 : vector<1x128xf32>
    %377 = arith.extui %376 : vector<1x128xi1> to vector<1x128xi32>
    %378 = arith.sitofp %377 : vector<1x128xi32> to vector<1x128xf32>
    %379 = vector.shape_cast %340 : vector<7x128xf32> to vector<1x7x128xf32>
    %380 = vector.broadcast %379 : vector<1x7x128xf32> to vector<3x7x128xf32>
    %381 = arith.mulf %2, %380 : vector<3x7x128xf32>
    %382 = arith.subf %381, %331 : vector<3x7x128xf32>
    %383 = arith.maximumf %255, %378 : vector<1x128xf32>
    %cst_58 = arith.constant 5.000000e-01 : f32
    %384 = vector.broadcast %cst_58 : f32 to vector<1x128xf32>
    %385 = arith.cmpf ogt, %255, %384 : vector<1x128xf32>
    %386 = vector.shape_cast %385 : vector<1x128xi1> to vector<1x128xi1>
    %387 = vector.broadcast %386 : vector<1x128xi1> to vector<7x128xi1>
    %388 = arith.select %387, %260, %340 : vector<7x128xi1>, vector<7x128xf32>
    %389 = vector.shape_cast %383 : vector<1x128xf32> to vector<1x1x128xf32>
    %cst_59 = arith.constant 5.000000e-01 : f32
    %390 = vector.broadcast %cst_59 : f32 to vector<1x1x128xf32>
    %391 = arith.cmpf ogt, %389, %390 : vector<1x1x128xf32>
    %392 = vector.shape_cast %391 : vector<1x1x128xi1> to vector<1x1x128xi1>
    %393 = vector.broadcast %392 : vector<1x1x128xi1> to vector<3x7x128xi1>
    %394 = arith.select %393, %266, %382 : vector<3x7x128xi1>, vector<3x7x128xf32>
    %c3_i32 = arith.constant 3 : i32
    %cst_60 = arith.constant 5.000000e-01 : f32
    %395 = vector.broadcast %cst_60 : f32 to vector<3x7x128xf32>
    %396 = arith.mulf %394, %395 : vector<3x7x128xf32>
    %397 = math.tanh %396 : vector<3x7x128xf32>
    %398 = math.absf %397 : vector<3x7x128xf32>
    %399 = math.log %398 : vector<3x7x128xf32>
    %cst_61 = arith.constant 0.000000e+00 : f32
    %400 = vector.broadcast %cst_61 : f32 to vector<3x7x128xf32>
    %401 = arith.select %4, %399, %400 : vector<3x7x128xi1>, vector<3x7x128xf32>
    %402 = vector.extract_strided_slice %401 {offsets = [0, 0, 0], sizes = [3, 1, 128], strides = [1, 1, 1]} : vector<3x7x128xf32> to vector<3x1x128xf32>
    %403 = vector.extract_strided_slice %401 {offsets = [0, 1, 0], sizes = [3, 1, 128], strides = [1, 1, 1]} : vector<3x7x128xf32> to vector<3x1x128xf32>
    %404 = arith.addf %402, %403 : vector<3x1x128xf32>
    %405 = vector.extract_strided_slice %401 {offsets = [0, 2, 0], sizes = [3, 1, 128], strides = [1, 1, 1]} : vector<3x7x128xf32> to vector<3x1x128xf32>
    %406 = arith.addf %404, %405 : vector<3x1x128xf32>
    %407 = vector.extract_strided_slice %401 {offsets = [0, 3, 0], sizes = [3, 1, 128], strides = [1, 1, 1]} : vector<3x7x128xf32> to vector<3x1x128xf32>
    %408 = arith.addf %406, %407 : vector<3x1x128xf32>
    %409 = vector.extract_strided_slice %401 {offsets = [0, 4, 0], sizes = [3, 1, 128], strides = [1, 1, 1]} : vector<3x7x128xf32> to vector<3x1x128xf32>
    %410 = arith.addf %408, %409 : vector<3x1x128xf32>
    %411 = vector.extract_strided_slice %401 {offsets = [0, 5, 0], sizes = [3, 1, 128], strides = [1, 1, 1]} : vector<3x7x128xf32> to vector<3x1x128xf32>
    %412 = arith.addf %410, %411 : vector<3x1x128xf32>
    %413 = vector.extract_strided_slice %401 {offsets = [0, 6, 0], sizes = [3, 1, 128], strides = [1, 1, 1]} : vector<3x7x128xf32> to vector<3x1x128xf32>
    %414 = arith.addf %412, %413 : vector<3x1x128xf32>
    %415 = vector.broadcast %414 : vector<3x1x128xf32> to vector<3x7x128xf32>
    %416 = arith.subf %415, %401 : vector<3x7x128xf32>
    %cst_62 = arith.constant 5.000000e-01 : f32
    %417 = vector.broadcast %cst_62 : f32 to vector<3x7x128xf32>
    %418 = arith.mulf %416, %417 : vector<3x7x128xf32>
    %419 = math.tanh %418 : vector<3x7x128xf32>
    %420 = math.absf %419 : vector<3x7x128xf32>
    %421 = math.log %420 : vector<3x7x128xf32>
    %cst_63 = arith.constant 0.000000e+00 : f32
    %422 = vector.broadcast %cst_63 : f32 to vector<3x7x128xf32>
    %423 = arith.select %4, %421, %422 : vector<3x7x128xi1>, vector<3x7x128xf32>
    %cst_64 = arith.constant 0.000000e+00 : f32
    %424 = vector.broadcast %cst_64 : f32 to vector<3x7x128xf32>
    %425 = arith.cmpf olt, %394, %424 : vector<3x7x128xf32>
    %426 = arith.extui %425 : vector<3x7x128xi1> to vector<3x7x128xi32>
    %427 = arith.sitofp %426 : vector<3x7x128xi32> to vector<3x7x128xf32>
    %428 = vector.extract_strided_slice %427 {offsets = [0, 0, 0], sizes = [3, 1, 128], strides = [1, 1, 1]} : vector<3x7x128xf32> to vector<3x1x128xf32>
    %429 = vector.extract_strided_slice %427 {offsets = [0, 1, 0], sizes = [3, 1, 128], strides = [1, 1, 1]} : vector<3x7x128xf32> to vector<3x1x128xf32>
    %430 = arith.addf %428, %429 : vector<3x1x128xf32>
    %431 = vector.extract_strided_slice %427 {offsets = [0, 2, 0], sizes = [3, 1, 128], strides = [1, 1, 1]} : vector<3x7x128xf32> to vector<3x1x128xf32>
    %432 = arith.addf %430, %431 : vector<3x1x128xf32>
    %433 = vector.extract_strided_slice %427 {offsets = [0, 3, 0], sizes = [3, 1, 128], strides = [1, 1, 1]} : vector<3x7x128xf32> to vector<3x1x128xf32>
    %434 = arith.addf %432, %433 : vector<3x1x128xf32>
    %435 = vector.extract_strided_slice %427 {offsets = [0, 4, 0], sizes = [3, 1, 128], strides = [1, 1, 1]} : vector<3x7x128xf32> to vector<3x1x128xf32>
    %436 = arith.addf %434, %435 : vector<3x1x128xf32>
    %437 = vector.extract_strided_slice %427 {offsets = [0, 5, 0], sizes = [3, 1, 128], strides = [1, 1, 1]} : vector<3x7x128xf32> to vector<3x1x128xf32>
    %438 = arith.addf %436, %437 : vector<3x1x128xf32>
    %439 = vector.extract_strided_slice %427 {offsets = [0, 6, 0], sizes = [3, 1, 128], strides = [1, 1, 1]} : vector<3x7x128xf32> to vector<3x1x128xf32>
    %440 = arith.addf %438, %439 : vector<3x1x128xf32>
    %cst_65 = arith.constant 5.000000e-01 : f32
    %441 = vector.broadcast %cst_65 : f32 to vector<3x1x128xf32>
    %442 = arith.mulf %440, %441 : vector<3x1x128xf32>
    %443 = math.floor %442 : vector<3x1x128xf32>
    %cst_66 = arith.constant 2.000000e+00 : f32
    %444 = vector.broadcast %cst_66 : f32 to vector<3x1x128xf32>
    %445 = arith.mulf %444, %443 : vector<3x1x128xf32>
    %446 = arith.subf %440, %445 : vector<3x1x128xf32>
    %cst_67 = arith.constant 2.000000e+00 : f32
    %447 = vector.broadcast %cst_67 : f32 to vector<3x1x128xf32>
    %448 = arith.mulf %447, %446 : vector<3x1x128xf32>
    %cst_68 = arith.constant 1.000000e+00 : f32
    %449 = vector.broadcast %cst_68 : f32 to vector<3x1x128xf32>
    %450 = arith.subf %449, %448 : vector<3x1x128xf32>
    %cst_69 = arith.constant 2.000000e+00 : f32
    %451 = vector.broadcast %cst_69 : f32 to vector<3x7x128xf32>
    %452 = arith.mulf %451, %427 : vector<3x7x128xf32>
    %cst_70 = arith.constant 1.000000e+00 : f32
    %453 = vector.broadcast %cst_70 : f32 to vector<3x7x128xf32>
    %454 = arith.subf %453, %452 : vector<3x7x128xf32>
    %455 = vector.broadcast %450 : vector<3x1x128xf32> to vector<3x7x128xf32>
    %456 = arith.mulf %455, %454 : vector<3x7x128xf32>
    %cst_71 = arith.constant 0.000000e+00 : f32
    %457 = vector.broadcast %cst_71 : f32 to vector<3x7x128xf32>
    %458 = arith.subf %457, %423 : vector<3x7x128xf32>
    %459 = arith.mulf %458, %456 : vector<3x7x128xf32>
    %460 = vector.extract_strided_slice %459 {offsets = [0, 0, 0], sizes = [1, 7, 128], strides = [1, 1, 1]} : vector<3x7x128xf32> to vector<1x7x128xf32>
    %461 = vector.shape_cast %460 : vector<1x7x128xf32> to vector<7x128xf32>
    %462 = vector.extract_strided_slice %459 {offsets = [1, 0, 0], sizes = [1, 7, 128], strides = [1, 1, 1]} : vector<3x7x128xf32> to vector<1x7x128xf32>
    %463 = vector.shape_cast %462 : vector<1x7x128xf32> to vector<7x128xf32>
    %464 = arith.addf %461, %463 : vector<7x128xf32>
    %465 = vector.extract_strided_slice %459 {offsets = [2, 0, 0], sizes = [1, 7, 128], strides = [1, 1, 1]} : vector<3x7x128xf32> to vector<1x7x128xf32>
    %466 = vector.shape_cast %465 : vector<1x7x128xf32> to vector<7x128xf32>
    %467 = arith.addf %464, %466 : vector<7x128xf32>
    %468 = arith.addf %5, %467 : vector<7x128xf32>
    %cst_72 = arith.constant 0.000000e+00 : f32
    %469 = vector.broadcast %cst_72 : f32 to vector<7x128xf32>
    %470 = arith.cmpf olt, %468, %469 : vector<7x128xf32>
    %471 = arith.extui %470 : vector<7x128xi1> to vector<7x128xi32>
    %472 = arith.sitofp %471 : vector<7x128xi32> to vector<7x128xf32>
    %473 = vector.shape_cast %472 : vector<7x128xf32> to vector<1x7x128xf32>
    %474 = vector.broadcast %473 : vector<1x7x128xf32> to vector<3x7x128xf32>
    %475 = arith.mulf %2, %474 : vector<3x7x128xf32>
    %476 = vector.extract_strided_slice %475 {offsets = [0, 0, 0], sizes = [3, 1, 128], strides = [1, 1, 1]} : vector<3x7x128xf32> to vector<3x1x128xf32>
    %477 = vector.extract_strided_slice %475 {offsets = [0, 1, 0], sizes = [3, 1, 128], strides = [1, 1, 1]} : vector<3x7x128xf32> to vector<3x1x128xf32>
    %478 = arith.addf %476, %477 : vector<3x1x128xf32>
    %479 = vector.extract_strided_slice %475 {offsets = [0, 2, 0], sizes = [3, 1, 128], strides = [1, 1, 1]} : vector<3x7x128xf32> to vector<3x1x128xf32>
    %480 = arith.addf %478, %479 : vector<3x1x128xf32>
    %481 = vector.extract_strided_slice %475 {offsets = [0, 3, 0], sizes = [3, 1, 128], strides = [1, 1, 1]} : vector<3x7x128xf32> to vector<3x1x128xf32>
    %482 = arith.addf %480, %481 : vector<3x1x128xf32>
    %483 = vector.extract_strided_slice %475 {offsets = [0, 4, 0], sizes = [3, 1, 128], strides = [1, 1, 1]} : vector<3x7x128xf32> to vector<3x1x128xf32>
    %484 = arith.addf %482, %483 : vector<3x1x128xf32>
    %485 = vector.extract_strided_slice %475 {offsets = [0, 5, 0], sizes = [3, 1, 128], strides = [1, 1, 1]} : vector<3x7x128xf32> to vector<3x1x128xf32>
    %486 = arith.addf %484, %485 : vector<3x1x128xf32>
    %487 = vector.extract_strided_slice %475 {offsets = [0, 6, 0], sizes = [3, 1, 128], strides = [1, 1, 1]} : vector<3x7x128xf32> to vector<3x1x128xf32>
    %488 = arith.addf %486, %487 : vector<3x1x128xf32>
    %cst_73 = arith.constant 5.000000e-01 : f32
    %489 = vector.broadcast %cst_73 : f32 to vector<3x1x128xf32>
    %490 = arith.mulf %488, %489 : vector<3x1x128xf32>
    %491 = math.floor %490 : vector<3x1x128xf32>
    %cst_74 = arith.constant 2.000000e+00 : f32
    %492 = vector.broadcast %cst_74 : f32 to vector<3x1x128xf32>
    %493 = arith.mulf %492, %491 : vector<3x1x128xf32>
    %494 = arith.subf %488, %493 : vector<3x1x128xf32>
    %495 = vector.extract_strided_slice %494 {offsets = [0, 0, 0], sizes = [1, 1, 128], strides = [1, 1, 1]} : vector<3x1x128xf32> to vector<1x1x128xf32>
    %496 = vector.shape_cast %495 : vector<1x1x128xf32> to vector<1x128xf32>
    %497 = vector.extract_strided_slice %494 {offsets = [1, 0, 0], sizes = [1, 1, 128], strides = [1, 1, 1]} : vector<3x1x128xf32> to vector<1x1x128xf32>
    %498 = vector.shape_cast %497 : vector<1x1x128xf32> to vector<1x128xf32>
    %499 = arith.addf %496, %498 : vector<1x128xf32>
    %500 = vector.extract_strided_slice %494 {offsets = [2, 0, 0], sizes = [1, 1, 128], strides = [1, 1, 1]} : vector<3x1x128xf32> to vector<1x1x128xf32>
    %501 = vector.shape_cast %500 : vector<1x1x128xf32> to vector<1x128xf32>
    %502 = arith.addf %499, %501 : vector<1x128xf32>
    %cst_75 = arith.constant 0.000000e+00 : f32
    %503 = vector.broadcast %cst_75 : f32 to vector<1x128xf32>
    %504 = arith.cmpf oeq, %502, %503 : vector<1x128xf32>
    %505 = arith.extui %504 : vector<1x128xi1> to vector<1x128xi32>
    %506 = arith.sitofp %505 : vector<1x128xi32> to vector<1x128xf32>
    %507 = vector.shape_cast %468 : vector<7x128xf32> to vector<1x7x128xf32>
    %508 = vector.broadcast %507 : vector<1x7x128xf32> to vector<3x7x128xf32>
    %509 = arith.mulf %2, %508 : vector<3x7x128xf32>
    %510 = arith.subf %509, %459 : vector<3x7x128xf32>
    %511 = arith.maximumf %383, %506 : vector<1x128xf32>
    %cst_76 = arith.constant 5.000000e-01 : f32
    %512 = vector.broadcast %cst_76 : f32 to vector<1x128xf32>
    %513 = arith.cmpf ogt, %383, %512 : vector<1x128xf32>
    %514 = vector.shape_cast %513 : vector<1x128xi1> to vector<1x128xi1>
    %515 = vector.broadcast %514 : vector<1x128xi1> to vector<7x128xi1>
    %516 = arith.select %515, %388, %468 : vector<7x128xi1>, vector<7x128xf32>
    %517 = vector.shape_cast %511 : vector<1x128xf32> to vector<1x1x128xf32>
    %cst_77 = arith.constant 5.000000e-01 : f32
    %518 = vector.broadcast %cst_77 : f32 to vector<1x1x128xf32>
    %519 = arith.cmpf ogt, %517, %518 : vector<1x1x128xf32>
    %520 = vector.shape_cast %519 : vector<1x1x128xi1> to vector<1x1x128xi1>
    %521 = vector.broadcast %520 : vector<1x1x128xi1> to vector<3x7x128xi1>
    %522 = arith.select %521, %394, %510 : vector<3x7x128xi1>, vector<3x7x128xf32>
    %c4_i32 = arith.constant 4 : i32
    %cst_78 = arith.constant 5.000000e-01 : f32
    %523 = vector.broadcast %cst_78 : f32 to vector<3x7x128xf32>
    %524 = arith.mulf %522, %523 : vector<3x7x128xf32>
    %525 = math.tanh %524 : vector<3x7x128xf32>
    %526 = math.absf %525 : vector<3x7x128xf32>
    %527 = math.log %526 : vector<3x7x128xf32>
    %cst_79 = arith.constant 0.000000e+00 : f32
    %528 = vector.broadcast %cst_79 : f32 to vector<3x7x128xf32>
    %529 = arith.select %4, %527, %528 : vector<3x7x128xi1>, vector<3x7x128xf32>
    %530 = vector.extract_strided_slice %529 {offsets = [0, 0, 0], sizes = [3, 1, 128], strides = [1, 1, 1]} : vector<3x7x128xf32> to vector<3x1x128xf32>
    %531 = vector.extract_strided_slice %529 {offsets = [0, 1, 0], sizes = [3, 1, 128], strides = [1, 1, 1]} : vector<3x7x128xf32> to vector<3x1x128xf32>
    %532 = arith.addf %530, %531 : vector<3x1x128xf32>
    %533 = vector.extract_strided_slice %529 {offsets = [0, 2, 0], sizes = [3, 1, 128], strides = [1, 1, 1]} : vector<3x7x128xf32> to vector<3x1x128xf32>
    %534 = arith.addf %532, %533 : vector<3x1x128xf32>
    %535 = vector.extract_strided_slice %529 {offsets = [0, 3, 0], sizes = [3, 1, 128], strides = [1, 1, 1]} : vector<3x7x128xf32> to vector<3x1x128xf32>
    %536 = arith.addf %534, %535 : vector<3x1x128xf32>
    %537 = vector.extract_strided_slice %529 {offsets = [0, 4, 0], sizes = [3, 1, 128], strides = [1, 1, 1]} : vector<3x7x128xf32> to vector<3x1x128xf32>
    %538 = arith.addf %536, %537 : vector<3x1x128xf32>
    %539 = vector.extract_strided_slice %529 {offsets = [0, 5, 0], sizes = [3, 1, 128], strides = [1, 1, 1]} : vector<3x7x128xf32> to vector<3x1x128xf32>
    %540 = arith.addf %538, %539 : vector<3x1x128xf32>
    %541 = vector.extract_strided_slice %529 {offsets = [0, 6, 0], sizes = [3, 1, 128], strides = [1, 1, 1]} : vector<3x7x128xf32> to vector<3x1x128xf32>
    %542 = arith.addf %540, %541 : vector<3x1x128xf32>
    %543 = vector.broadcast %542 : vector<3x1x128xf32> to vector<3x7x128xf32>
    %544 = arith.subf %543, %529 : vector<3x7x128xf32>
    %cst_80 = arith.constant 5.000000e-01 : f32
    %545 = vector.broadcast %cst_80 : f32 to vector<3x7x128xf32>
    %546 = arith.mulf %544, %545 : vector<3x7x128xf32>
    %547 = math.tanh %546 : vector<3x7x128xf32>
    %548 = math.absf %547 : vector<3x7x128xf32>
    %549 = math.log %548 : vector<3x7x128xf32>
    %cst_81 = arith.constant 0.000000e+00 : f32
    %550 = vector.broadcast %cst_81 : f32 to vector<3x7x128xf32>
    %551 = arith.select %4, %549, %550 : vector<3x7x128xi1>, vector<3x7x128xf32>
    %cst_82 = arith.constant 0.000000e+00 : f32
    %552 = vector.broadcast %cst_82 : f32 to vector<3x7x128xf32>
    %553 = arith.cmpf olt, %522, %552 : vector<3x7x128xf32>
    %554 = arith.extui %553 : vector<3x7x128xi1> to vector<3x7x128xi32>
    %555 = arith.sitofp %554 : vector<3x7x128xi32> to vector<3x7x128xf32>
    %556 = vector.extract_strided_slice %555 {offsets = [0, 0, 0], sizes = [3, 1, 128], strides = [1, 1, 1]} : vector<3x7x128xf32> to vector<3x1x128xf32>
    %557 = vector.extract_strided_slice %555 {offsets = [0, 1, 0], sizes = [3, 1, 128], strides = [1, 1, 1]} : vector<3x7x128xf32> to vector<3x1x128xf32>
    %558 = arith.addf %556, %557 : vector<3x1x128xf32>
    %559 = vector.extract_strided_slice %555 {offsets = [0, 2, 0], sizes = [3, 1, 128], strides = [1, 1, 1]} : vector<3x7x128xf32> to vector<3x1x128xf32>
    %560 = arith.addf %558, %559 : vector<3x1x128xf32>
    %561 = vector.extract_strided_slice %555 {offsets = [0, 3, 0], sizes = [3, 1, 128], strides = [1, 1, 1]} : vector<3x7x128xf32> to vector<3x1x128xf32>
    %562 = arith.addf %560, %561 : vector<3x1x128xf32>
    %563 = vector.extract_strided_slice %555 {offsets = [0, 4, 0], sizes = [3, 1, 128], strides = [1, 1, 1]} : vector<3x7x128xf32> to vector<3x1x128xf32>
    %564 = arith.addf %562, %563 : vector<3x1x128xf32>
    %565 = vector.extract_strided_slice %555 {offsets = [0, 5, 0], sizes = [3, 1, 128], strides = [1, 1, 1]} : vector<3x7x128xf32> to vector<3x1x128xf32>
    %566 = arith.addf %564, %565 : vector<3x1x128xf32>
    %567 = vector.extract_strided_slice %555 {offsets = [0, 6, 0], sizes = [3, 1, 128], strides = [1, 1, 1]} : vector<3x7x128xf32> to vector<3x1x128xf32>
    %568 = arith.addf %566, %567 : vector<3x1x128xf32>
    %cst_83 = arith.constant 5.000000e-01 : f32
    %569 = vector.broadcast %cst_83 : f32 to vector<3x1x128xf32>
    %570 = arith.mulf %568, %569 : vector<3x1x128xf32>
    %571 = math.floor %570 : vector<3x1x128xf32>
    %cst_84 = arith.constant 2.000000e+00 : f32
    %572 = vector.broadcast %cst_84 : f32 to vector<3x1x128xf32>
    %573 = arith.mulf %572, %571 : vector<3x1x128xf32>
    %574 = arith.subf %568, %573 : vector<3x1x128xf32>
    %cst_85 = arith.constant 2.000000e+00 : f32
    %575 = vector.broadcast %cst_85 : f32 to vector<3x1x128xf32>
    %576 = arith.mulf %575, %574 : vector<3x1x128xf32>
    %cst_86 = arith.constant 1.000000e+00 : f32
    %577 = vector.broadcast %cst_86 : f32 to vector<3x1x128xf32>
    %578 = arith.subf %577, %576 : vector<3x1x128xf32>
    %cst_87 = arith.constant 2.000000e+00 : f32
    %579 = vector.broadcast %cst_87 : f32 to vector<3x7x128xf32>
    %580 = arith.mulf %579, %555 : vector<3x7x128xf32>
    %cst_88 = arith.constant 1.000000e+00 : f32
    %581 = vector.broadcast %cst_88 : f32 to vector<3x7x128xf32>
    %582 = arith.subf %581, %580 : vector<3x7x128xf32>
    %583 = vector.broadcast %578 : vector<3x1x128xf32> to vector<3x7x128xf32>
    %584 = arith.mulf %583, %582 : vector<3x7x128xf32>
    %cst_89 = arith.constant 0.000000e+00 : f32
    %585 = vector.broadcast %cst_89 : f32 to vector<3x7x128xf32>
    %586 = arith.subf %585, %551 : vector<3x7x128xf32>
    %587 = arith.mulf %586, %584 : vector<3x7x128xf32>
    %588 = vector.extract_strided_slice %587 {offsets = [0, 0, 0], sizes = [1, 7, 128], strides = [1, 1, 1]} : vector<3x7x128xf32> to vector<1x7x128xf32>
    %589 = vector.shape_cast %588 : vector<1x7x128xf32> to vector<7x128xf32>
    %590 = vector.extract_strided_slice %587 {offsets = [1, 0, 0], sizes = [1, 7, 128], strides = [1, 1, 1]} : vector<3x7x128xf32> to vector<1x7x128xf32>
    %591 = vector.shape_cast %590 : vector<1x7x128xf32> to vector<7x128xf32>
    %592 = arith.addf %589, %591 : vector<7x128xf32>
    %593 = vector.extract_strided_slice %587 {offsets = [2, 0, 0], sizes = [1, 7, 128], strides = [1, 1, 1]} : vector<3x7x128xf32> to vector<1x7x128xf32>
    %594 = vector.shape_cast %593 : vector<1x7x128xf32> to vector<7x128xf32>
    %595 = arith.addf %592, %594 : vector<7x128xf32>
    %596 = arith.addf %5, %595 : vector<7x128xf32>
    %cst_90 = arith.constant 0.000000e+00 : f32
    %597 = vector.broadcast %cst_90 : f32 to vector<7x128xf32>
    %598 = arith.cmpf olt, %596, %597 : vector<7x128xf32>
    %599 = arith.extui %598 : vector<7x128xi1> to vector<7x128xi32>
    %600 = arith.sitofp %599 : vector<7x128xi32> to vector<7x128xf32>
    %601 = vector.shape_cast %600 : vector<7x128xf32> to vector<1x7x128xf32>
    %602 = vector.broadcast %601 : vector<1x7x128xf32> to vector<3x7x128xf32>
    %603 = arith.mulf %2, %602 : vector<3x7x128xf32>
    %604 = vector.extract_strided_slice %603 {offsets = [0, 0, 0], sizes = [3, 1, 128], strides = [1, 1, 1]} : vector<3x7x128xf32> to vector<3x1x128xf32>
    %605 = vector.extract_strided_slice %603 {offsets = [0, 1, 0], sizes = [3, 1, 128], strides = [1, 1, 1]} : vector<3x7x128xf32> to vector<3x1x128xf32>
    %606 = arith.addf %604, %605 : vector<3x1x128xf32>
    %607 = vector.extract_strided_slice %603 {offsets = [0, 2, 0], sizes = [3, 1, 128], strides = [1, 1, 1]} : vector<3x7x128xf32> to vector<3x1x128xf32>
    %608 = arith.addf %606, %607 : vector<3x1x128xf32>
    %609 = vector.extract_strided_slice %603 {offsets = [0, 3, 0], sizes = [3, 1, 128], strides = [1, 1, 1]} : vector<3x7x128xf32> to vector<3x1x128xf32>
    %610 = arith.addf %608, %609 : vector<3x1x128xf32>
    %611 = vector.extract_strided_slice %603 {offsets = [0, 4, 0], sizes = [3, 1, 128], strides = [1, 1, 1]} : vector<3x7x128xf32> to vector<3x1x128xf32>
    %612 = arith.addf %610, %611 : vector<3x1x128xf32>
    %613 = vector.extract_strided_slice %603 {offsets = [0, 5, 0], sizes = [3, 1, 128], strides = [1, 1, 1]} : vector<3x7x128xf32> to vector<3x1x128xf32>
    %614 = arith.addf %612, %613 : vector<3x1x128xf32>
    %615 = vector.extract_strided_slice %603 {offsets = [0, 6, 0], sizes = [3, 1, 128], strides = [1, 1, 1]} : vector<3x7x128xf32> to vector<3x1x128xf32>
    %616 = arith.addf %614, %615 : vector<3x1x128xf32>
    %cst_91 = arith.constant 5.000000e-01 : f32
    %617 = vector.broadcast %cst_91 : f32 to vector<3x1x128xf32>
    %618 = arith.mulf %616, %617 : vector<3x1x128xf32>
    %619 = math.floor %618 : vector<3x1x128xf32>
    %cst_92 = arith.constant 2.000000e+00 : f32
    %620 = vector.broadcast %cst_92 : f32 to vector<3x1x128xf32>
    %621 = arith.mulf %620, %619 : vector<3x1x128xf32>
    %622 = arith.subf %616, %621 : vector<3x1x128xf32>
    %623 = vector.extract_strided_slice %622 {offsets = [0, 0, 0], sizes = [1, 1, 128], strides = [1, 1, 1]} : vector<3x1x128xf32> to vector<1x1x128xf32>
    %624 = vector.shape_cast %623 : vector<1x1x128xf32> to vector<1x128xf32>
    %625 = vector.extract_strided_slice %622 {offsets = [1, 0, 0], sizes = [1, 1, 128], strides = [1, 1, 1]} : vector<3x1x128xf32> to vector<1x1x128xf32>
    %626 = vector.shape_cast %625 : vector<1x1x128xf32> to vector<1x128xf32>
    %627 = arith.addf %624, %626 : vector<1x128xf32>
    %628 = vector.extract_strided_slice %622 {offsets = [2, 0, 0], sizes = [1, 1, 128], strides = [1, 1, 1]} : vector<3x1x128xf32> to vector<1x1x128xf32>
    %629 = vector.shape_cast %628 : vector<1x1x128xf32> to vector<1x128xf32>
    %630 = arith.addf %627, %629 : vector<1x128xf32>
    %cst_93 = arith.constant 0.000000e+00 : f32
    %631 = vector.broadcast %cst_93 : f32 to vector<1x128xf32>
    %632 = arith.cmpf oeq, %630, %631 : vector<1x128xf32>
    %633 = arith.extui %632 : vector<1x128xi1> to vector<1x128xi32>
    %634 = arith.sitofp %633 : vector<1x128xi32> to vector<1x128xf32>
    %635 = vector.shape_cast %596 : vector<7x128xf32> to vector<1x7x128xf32>
    %636 = vector.broadcast %635 : vector<1x7x128xf32> to vector<3x7x128xf32>
    %637 = arith.mulf %2, %636 : vector<3x7x128xf32>
    %638 = arith.subf %637, %587 : vector<3x7x128xf32>
    %639 = arith.maximumf %511, %634 : vector<1x128xf32>
    %cst_94 = arith.constant 5.000000e-01 : f32
    %640 = vector.broadcast %cst_94 : f32 to vector<1x128xf32>
    %641 = arith.cmpf ogt, %511, %640 : vector<1x128xf32>
    %642 = vector.shape_cast %641 : vector<1x128xi1> to vector<1x128xi1>
    %643 = vector.broadcast %642 : vector<1x128xi1> to vector<7x128xi1>
    %644 = arith.select %643, %516, %596 : vector<7x128xi1>, vector<7x128xf32>
    %645 = vector.shape_cast %639 : vector<1x128xf32> to vector<1x1x128xf32>
    %cst_95 = arith.constant 5.000000e-01 : f32
    %646 = vector.broadcast %cst_95 : f32 to vector<1x1x128xf32>
    %647 = arith.cmpf ogt, %645, %646 : vector<1x1x128xf32>
    %648 = vector.shape_cast %647 : vector<1x1x128xi1> to vector<1x1x128xi1>
    %649 = vector.broadcast %648 : vector<1x1x128xi1> to vector<3x7x128xi1>
    %650 = arith.select %649, %522, %638 : vector<3x7x128xi1>, vector<3x7x128xf32>
    %c0_96 = arith.constant 0 : index
    %c0_97 = arith.constant 0 : index
    %651 = vector.load %arg3[%c0_96, %c0_97] : memref<7x128xf32, #tpu.memory_space<vmem>>, vector<7x128xf32>
    tpu.vector_store %arg3[%c0_96, %c0_97], %644 {strides = array<i32>} : memref<7x128xf32, #tpu.memory_space<vmem>>, vector<7x128xf32>,
    return
  }
  func.func @transform_0(%arg0: i32) -> (i32, i32) {
    %c0_i32 = arith.constant 0 : i32
    %c0_i32_0 = arith.constant 0 : i32
    return %c0_i32, %arg0 : i32, i32
  }
  func.func @transform_1(%arg0: i32) -> (i32, i32, i32) {
    %c0_i32 = arith.constant 0 : i32
    %c0_i32_0 = arith.constant 0 : i32
    %c0_i32_1 = arith.constant 0 : i32
    %c0_i32_2 = arith.constant 0 : i32
    return %c0_i32, %c0_i32_0, %c0_i32_1 : i32, i32, i32
  }
  func.func @transform_2(%arg0: i32) -> (i32, i32) {
    %c0_i32 = arith.constant 0 : i32
    %c0_i32_0 = arith.constant 0 : i32
    return %c0_i32, %arg0 : i32, i32
  }
}

</mosaic_0001>

<llo_original>
// kernel: tpu_custom_call.1
$region0: #{tpu_custom_call.1}
  #allocation0 [shape = 'u32[]', space=smem, size = 0x4, offset = 0x4, fixed_abs, tag = 'smem constant byte address 0x4 - core index']
  #allocation1 [shape = 'u32[72,128]{1,0:T(1,128)}', space=vmem, size = 0x9000, scoped, tag = 'internal scratch']
  %s0 = inlined_call_operand.vmem [shape: f32[7,128], index: 0, kind: input, shape index: {}]
  %s1 = inlined_call_operand.vmem [shape: f32[3,7,1], index: 1, kind: input, shape index: {}]
  %s2 = inlined_call_operand.hbm [shape: f32[7,128], index: 2, kind: output, shape index: {}]
  %s3 = sld [smem:[#allocation0]]
  $region18: #{tpu_custom_call.1} parent=0
    _
  %s5 = ssub.s32 1, %s3
  %s6 = scalar_select 0, %s5, %s3
  $region1: #{tpu_custom_call.1} parent=0
    #allocation2 [shape = 'u8[4096]{0}', space=vmem, size = 0x1000, scoped, tag = 'output window, operand 0, single buffered']
    #allocation3 [shape = 's32[1]{0}', space=sflag, size = 0x4, scoped, tag = 'scoped memory for tpu_custom_call.1']
    %7 = vsyncpa [#allocation3], 0
    // Predicated region
    $region2: #{tpu_custom_call.1} parent=1 // pred_check
      _
    $region3: #{tpu_custom_call.1} parent=1 // pred_check_branch
      %9 = sbr.rel (0) target = $region5
    $region4: #{tpu_custom_call.1} parent=1 // pred_region
      _
    $region5: #{tpu_custom_call.1} parent=1 // pred_fallthru
      _
    // Predicated region
    $region6: #{tpu_custom_call.1} parent=1 // pred_check
      _
    $region7: #{tpu_custom_call.1} parent=1 // pred_check_branch
      %11 = sbr.rel (0) target = $region9
    $region8: #{tpu_custom_call.1} parent=1 // pred_region
      _
    $region9: #{tpu_custom_call.1} parent=1 // pred_fallthru
      _
    %v12 = vld [vmem:[%s1] sm:$0x7f]
    %v13 = vld [vmem:[%s1 + $0x8] sm:$0x7f]
    %v14 = vld [vmem:[%s1 + $0x10] sm:$0x7f]
    %16 = vset.pattern.permute.xlu0 0
    %17 = vperm.xlu0 %16, %v12
    %v18 = vpop.permute.xlu0 %17
    %21 = vset.pattern.permute.xlu0 0
    %22 = vperm.xlu0 %21, %v13
    %v23 = vpop.permute.xlu0 %22
    %26 = vset.pattern.permute.xlu0 0
    %27 = vperm.xlu0 %26, %v14
    %v28 = vpop.permute.xlu0 %27
    %vm30 = vcmp.eq.f32.partialorder %v18, 1.0
    %vm31 = vcmp.eq.f32.partialorder %v23, 1.0
    %vm32 = vcmp.eq.f32.partialorder %v28, 1.0
    %v33 = vld [vmem:[%s0] sm:$0x7f]
    %v34 = vmul.f32 %v18, %v33
    %v35 = vmul.f32 %v23, %v33
    %v36 = vmul.f32 %v28, %v33
    %v37 = vmul.f32 %v34, 0.5
    %v38 = vmul.f32 %v35, 0.5
    %v39 = vmul.f32 %v36, 0.5
    %v40 = vtanh.pop %v37
    %v41 = vtanh.pop %v38
    %v42 = vtanh.pop %v39
    %v43 = vand.u32 2147483647, %v40
    %v44 = vand.u32 2147483647, %v41
    %v45 = vand.u32 2147483647, %v42
    %v46 = vlog2.pop %v43
    %v47 = vmul.f32 %v46, 0.6931472
    %v48 = vlog2.pop %v44
    %v49 = vmul.f32 %v48, 0.6931472
    %v50 = vlog2.pop %v45
    %v51 = vmul.f32 %v50, 0.6931472
    %v52 = vsel %vm30, %v47, 0.0
    %v53 = vsel %vm31, %v49, 0.0
    %v54 = vsel %vm32, %v51, 0.0
    %v58 = vrot.slane %v52, 1
    %v59 = vrot.slane %v53, 1
    %v60 = vrot.slane %v54, 1
    %v64 = vadd.f32 %v52, %v58
    %v65 = vadd.f32 %v53, %v59
    %v66 = vadd.f32 %v54, %v60
    %v67 = vrot.slane %v52, 2
    %v68 = vrot.slane %v53, 2
    %v69 = vrot.slane %v54, 2
    %v73 = vadd.f32 %v64, %v67
    %v74 = vadd.f32 %v65, %v68
    %v75 = vadd.f32 %v66, %v69
    %v76 = vrot.slane %v52, 3
    %v77 = vrot.slane %v53, 3
    %v78 = vrot.slane %v54, 3
    %v82 = vadd.f32 %v73, %v76
    %v83 = vadd.f32 %v74, %v77
    %v84 = vadd.f32 %v75, %v78
    %v85 = vrot.slane %v52, 4
    %v86 = vrot.slane %v53, 4
    %v87 = vrot.slane %v54, 4
    %v91 = vadd.f32 %v82, %v85
    %v92 = vadd.f32 %v83, %v86
    %v93 = vadd.f32 %v84, %v87
    %v94 = vrot.slane %v52, 5
    %v95 = vrot.slane %v53, 5
    %v96 = vrot.slane %v54, 5
    %v100 = vadd.f32 %v91, %v94
    %v101 = vadd.f32 %v92, %v95
    %v102 = vadd.f32 %v93, %v96
    %v103 = vrot.slane %v52, 6
    %v104 = vrot.slane %v53, 6
    %v105 = vrot.slane %v54, 6
    %v109 = vadd.f32 %v100, %v103
    %v110 = vadd.f32 %v101, %v104
    %v111 = vadd.f32 %v102, %v105
    %v112 = vperm.slane %v109, 0
    %v113 = vperm.slane %v110, 0
    %v114 = vperm.slane %v111, 0
    %v115 = vsub.f32 %v112, %v52
    %v116 = vsub.f32 %v113, %v53
    %v117 = vsub.f32 %v114, %v54
    %v118 = vmul.f32 %v115, 0.5
    %v119 = vmul.f32 %v116, 0.5
    %v120 = vmul.f32 %v117, 0.5
    %v121 = vtanh.pop %v118
    %v122 = vtanh.pop %v119
    %v123 = vtanh.pop %v120
    %v124 = vand.u32 2147483647, %v121
    %v125 = vand.u32 2147483647, %v122
    %v126 = vand.u32 2147483647, %v123
    %v127 = vlog2.pop %v124
    %v128 = vmul.f32 %v127, 0.6931472
    %v129 = vlog2.pop %v125
    %v130 = vmul.f32 %v129, 0.6931472
    %v131 = vlog2.pop %v126
    %v132 = vmul.f32 %v131, 0.6931472
    %v133 = vsel %vm30, %v128, 0.0
    %v134 = vsel %vm31, %v130, 0.0
    %v135 = vsel %vm32, %v132, 0.0
    %vm136 = vcmp.lt.f32.partialorder %v34, 0.0
    %vm137 = vcmp.lt.f32.partialorder %v35, 0.0
    %vm138 = vcmp.lt.f32.partialorder %v36, 0.0
    %v139 = vsel %vm136, 1, 0
    %v140 = vsel %vm137, 1, 0
    %v141 = vsel %vm138, 1, 0
    %v142 = vcvt.s32.f32 %v139
    %v143 = vcvt.s32.f32 %v140
    %v144 = vcvt.s32.f32 %v141
    %v148 = vrot.slane %v142, 1
    %v149 = vrot.slane %v143, 1
    %v150 = vrot.slane %v144, 1
    %v154 = vadd.f32 %v142, %v148
    %v155 = vadd.f32 %v143, %v149
    %v156 = vadd.f32 %v144, %v150
    %v157 = vrot.slane %v142, 2
    %v158 = vrot.slane %v143, 2
    %v159 = vrot.slane %v144, 2
    %v163 = vadd.f32 %v154, %v157
    %v164 = vadd.f32 %v155, %v158
    %v165 = vadd.f32 %v156, %v159
    %v166 = vrot.slane %v142, 3
    %v167 = vrot.slane %v143, 3
    %v168 = vrot.slane %v144, 3
    %v172 = vadd.f32 %v163, %v166
    %v173 = vadd.f32 %v164, %v167
    %v174 = vadd.f32 %v165, %v168
    %v175 = vrot.slane %v142, 4
    %v176 = vrot.slane %v143, 4
    %v177 = vrot.slane %v144, 4
    %v181 = vadd.f32 %v172, %v175
    %v182 = vadd.f32 %v173, %v176
    %v183 = vadd.f32 %v174, %v177
    %v184 = vrot.slane %v142, 5
    %v185 = vrot.slane %v143, 5
    %v186 = vrot.slane %v144, 5
    %v190 = vadd.f32 %v181, %v184
    %v191 = vadd.f32 %v182, %v185
    %v192 = vadd.f32 %v183, %v186
    %v193 = vrot.slane %v142, 6
    %v194 = vrot.slane %v143, 6
    %v195 = vrot.slane %v144, 6
    %v199 = vadd.f32 %v190, %v193
    %v200 = vadd.f32 %v191, %v194
    %v201 = vadd.f32 %v192, %v195
    %v202 = vmul.f32 %v199, 0.5
    %v203 = vmul.f32 %v200, 0.5
    %v204 = vmul.f32 %v201, 0.5
    %v205 = vfloor.f32 %v202
    %v206 = vfloor.f32 %v203
    %v207 = vfloor.f32 %v204
    %v208 = vmul.f32 %v205, 2.0
    %v209 = vmul.f32 %v206, 2.0
    %v210 = vmul.f32 %v207, 2.0
    %v211 = vsub.f32 %v199, %v208
    %v212 = vsub.f32 %v200, %v209
    %v213 = vsub.f32 %v201, %v210
    %v214 = vmul.f32 %v211, 2.0
    %v215 = vmul.f32 %v212, 2.0
    %v216 = vmul.f32 %v213, 2.0
    %v217 = vsub.f32 1.0, %v214
    %v218 = vsub.f32 1.0, %v215
    %v219 = vsub.f32 1.0, %v216
    %v220 = vmul.f32 %v142, 2.0
    %v221 = vmul.f32 %v143, 2.0
    %v222 = vmul.f32 %v144, 2.0
    %v223 = vsub.f32 1.0, %v220
    %v224 = vsub.f32 1.0, %v221
    %v225 = vsub.f32 1.0, %v222
    %v226 = vperm.slane %v217, 0
    %v227 = vperm.slane %v218, 0
    %v228 = vperm.slane %v219, 0
    %v229 = vmul.f32 %v226, %v223
    %v230 = vmul.f32 %v227, %v224
    %v231 = vmul.f32 %v228, %v225
    %v232 = vsub.f32 0.0, %v133
    %v233 = vsub.f32 0.0, %v134
    %v234 = vsub.f32 0.0, %v135
    %v235 = vmul.f32 %v232, %v229
    %v236 = vmul.f32 %v233, %v230
    %v237 = vmul.f32 %v234, %v231
    %v238 = vadd.f32 %v235, %v236
    %v239 = vadd.f32 %v238, %v237
    %v240 = vadd.f32 %v33, %v239
    %vm241 = vcmp.lt.f32.partialorder %v240, 0.0
    %v242 = vsel %vm241, 1, 0
    %v243 = vcvt.s32.f32 %v242
    %v244 = vmul.f32 %v18, %v243
    %v245 = vmul.f32 %v23, %v243
    %v246 = vmul.f32 %v28, %v243
    %v250 = vrot.slane %v244, 1
    %v251 = vrot.slane %v245, 1
    %v252 = vrot.slane %v246, 1
    %v256 = vadd.f32 %v244, %v250
    %v257 = vadd.f32 %v245, %v251
    %v258 = vadd.f32 %v246, %v252
    %v259 = vrot.slane %v244, 2
    %v260 = vrot.slane %v245, 2
    %v261 = vrot.slane %v246, 2
    %v265 = vadd.f32 %v256, %v259
    %v266 = vadd.f32 %v257, %v260
    %v267 = vadd.f32 %v258, %v261
    %v268 = vrot.slane %v244, 3
    %v269 = vrot.slane %v245, 3
    %v270 = vrot.slane %v246, 3
    %v274 = vadd.f32 %v265, %v268
    %v275 = vadd.f32 %v266, %v269
    %v276 = vadd.f32 %v267, %v270
    %v277 = vrot.slane %v244, 4
    %v278 = vrot.slane %v245, 4
    %v279 = vrot.slane %v246, 4
    %v283 = vadd.f32 %v274, %v277
    %v284 = vadd.f32 %v275, %v278
    %v285 = vadd.f32 %v276, %v279
    %v286 = vrot.slane %v244, 5
    %v287 = vrot.slane %v245, 5
    %v288 = vrot.slane %v246, 5
    %v292 = vadd.f32 %v283, %v286
    %v293 = vadd.f32 %v284, %v287
    %v294 = vadd.f32 %v285, %v288
    %v295 = vrot.slane %v244, 6
    %v296 = vrot.slane %v245, 6
    %v297 = vrot.slane %v246, 6
    %v301 = vadd.f32 %v292, %v295
    %v302 = vadd.f32 %v293, %v296
    %v303 = vadd.f32 %v294, %v297
    %v304 = vmul.f32 %v301, 0.5
    %v305 = vmul.f32 %v302, 0.5
    %v306 = vmul.f32 %v303, 0.5
    %v307 = vfloor.f32 %v304
    %v308 = vfloor.f32 %v305
    %v309 = vfloor.f32 %v306
    %v310 = vmul.f32 %v307, 2.0
    %v311 = vmul.f32 %v308, 2.0
    %v312 = vmul.f32 %v309, 2.0
    %v313 = vsub.f32 %v301, %v310
    %v314 = vsub.f32 %v302, %v311
    %v315 = vsub.f32 %v303, %v312
    %v316 = vadd.f32 %v313, %v314
    %v317 = vadd.f32 %v316, %v315
    %vm318 = vcmp.eq.f32.partialorder %v317, 0.0
    %v319 = vsel %vm318, 1, 0
    %v320 = vcvt.s32.f32 %v319
    %v321 = vmul.f32 %v18, %v240
    %v322 = vmul.f32 %v23, %v240
    %v323 = vmul.f32 %v28, %v240
    %v324 = vsub.f32 %v321, %v235
    %v325 = vsub.f32 %v322, %v236
    %v326 = vsub.f32 %v323, %v237
    %v327 = vmax.f32 %v320, 0.0
    %vm328 = vcmp.gt.f32.partialorder 0.0, 0.5
    %v329 = vsel %vm328, 1, 0
    %vm330 = vcmp.eq.s32.totalorder %v329, 1
    %v331 = vsel %vm330, 0.0, %v240
    %vm332 = vcmp.gt.f32.partialorder %v327, 0.5
    %v333 = vsel %vm332, 1, 0
    %v334 = vperm.slane %v333, 0
    %vm335 = vcmp.eq.s32.totalorder %v334, 1
    %v336 = vsel %vm335, %v34, %v324
    %v337 = vsel %vm335, %v35, %v325
    %v338 = vsel %vm335, %v36, %v326
    %v339 = vmul.f32 %v336, 0.5
    %v340 = vmul.f32 %v337, 0.5
    %v341 = vmul.f32 %v338, 0.5
    %v342 = vtanh.pop %v339
    %v343 = vtanh.pop %v340
    %v344 = vtanh.pop %v341
    %v345 = vand.u32 2147483647, %v342
    %v346 = vand.u32 2147483647, %v343
    %v347 = vand.u32 2147483647, %v344
    %v348 = vlog2.pop %v345
    %v349 = vmul.f32 %v348, 0.6931472
    %v350 = vlog2.pop %v346
    %v351 = vmul.f32 %v350, 0.6931472
    %v352 = vlog2.pop %v347
    %v353 = vmul.f32 %v352, 0.6931472
    %v354 = vsel %vm30, %v349, 0.0
    %v355 = vsel %vm31, %v351, 0.0
    %v356 = vsel %vm32, %v353, 0.0
    %v360 = vrot.slane %v354, 1
    %v361 = vrot.slane %v355, 1
    %v362 = vrot.slane %v356, 1
    %v366 = vadd.f32 %v354, %v360
    %v367 = vadd.f32 %v355, %v361
    %v368 = vadd.f32 %v356, %v362
    %v369 = vrot.slane %v354, 2
    %v370 = vrot.slane %v355, 2
    %v371 = vrot.slane %v356, 2
    %v375 = vadd.f32 %v366, %v369
    %v376 = vadd.f32 %v367, %v370
    %v377 = vadd.f32 %v368, %v371
    %v378 = vrot.slane %v354, 3
    %v379 = vrot.slane %v355, 3
    %v380 = vrot.slane %v356, 3
    %v384 = vadd.f32 %v375, %v378
    %v385 = vadd.f32 %v376, %v379
    %v386 = vadd.f32 %v377, %v380
    %v387 = vrot.slane %v354, 4
    %v388 = vrot.slane %v355, 4
    %v389 = vrot.slane %v356, 4
    %v393 = vadd.f32 %v384, %v387
    %v394 = vadd.f32 %v385, %v388
    %v395 = vadd.f32 %v386, %v389
    %v396 = vrot.slane %v354, 5
    %v397 = vrot.slane %v355, 5
    %v398 = vrot.slane %v356, 5
    %v402 = vadd.f32 %v393, %v396
    %v403 = vadd.f32 %v394, %v397
    %v404 = vadd.f32 %v395, %v398
    %v405 = vrot.slane %v354, 6
    %v406 = vrot.slane %v355, 6
    %v407 = vrot.slane %v356, 6
    %v411 = vadd.f32 %v402, %v405
    %v412 = vadd.f32 %v403, %v406
    %v413 = vadd.f32 %v404, %v407
    %v414 = vperm.slane %v411, 0
    %v415 = vperm.slane %v412, 0
    %v416 = vperm.slane %v413, 0
    %v417 = vsub.f32 %v414, %v354
    %v418 = vsub.f32 %v415, %v355
    %v419 = vsub.f32 %v416, %v356
    %v420 = vmul.f32 %v417, 0.5
    %v421 = vmul.f32 %v418, 0.5
    %v422 = vmul.f32 %v419, 0.5
    %v423 = vtanh.pop %v420
    %v424 = vtanh.pop %v421
    %v425 = vtanh.pop %v422
    %v426 = vand.u32 2147483647, %v423
    %v427 = vand.u32 2147483647, %v424
    %v428 = vand.u32 2147483647, %v425
    %v429 = vlog2.pop %v426
    %v430 = vmul.f32 %v429, 0.6931472
    %v431 = vlog2.pop %v427
    %v432 = vmul.f32 %v431, 0.6931472
    %v433 = vlog2.pop %v428
    %v434 = vmul.f32 %v433, 0.6931472
    %v435 = vsel %vm30, %v430, 0.0
    %v436 = vsel %vm31, %v432, 0.0
    %v437 = vsel %vm32, %v434, 0.0
    %vm438 = vcmp.lt.f32.partialorder %v336, 0.0
    %vm439 = vcmp.lt.f32.partialorder %v337, 0.0
    %vm440 = vcmp.lt.f32.partialorder %v338, 0.0
    %v441 = vsel %vm438, 1, 0
    %v442 = vsel %vm439, 1, 0
    %v443 = vsel %vm440, 1, 0
    %v444 = vcvt.s32.f32 %v441
    %v445 = vcvt.s32.f32 %v442
    %v446 = vcvt.s32.f32 %v443
    %v450 = vrot.slane %v444, 1
    %v451 = vrot.slane %v445, 1
    %v452 = vrot.slane %v446, 1
    %v456 = vadd.f32 %v444, %v450
    %v457 = vadd.f32 %v445, %v451
    %v458 = vadd.f32 %v446, %v452
    %v459 = vrot.slane %v444, 2
    %v460 = vrot.slane %v445, 2
    %v461 = vrot.slane %v446, 2
    %v465 = vadd.f32 %v456, %v459
    %v466 = vadd.f32 %v457, %v460
    %v467 = vadd.f32 %v458, %v461
    %v468 = vrot.slane %v444, 3
    %v469 = vrot.slane %v445, 3
    %v470 = vrot.slane %v446, 3
    %v474 = vadd.f32 %v465, %v468
    %v475 = vadd.f32 %v466, %v469
    %v476 = vadd.f32 %v467, %v470
    %v477 = vrot.slane %v444, 4
    %v478 = vrot.slane %v445, 4
    %v479 = vrot.slane %v446, 4
    %v483 = vadd.f32 %v474, %v477
    %v484 = vadd.f32 %v475, %v478
    %v485 = vadd.f32 %v476, %v479
    %v486 = vrot.slane %v444, 5
    %v487 = vrot.slane %v445, 5
    %v488 = vrot.slane %v446, 5
    %v492 = vadd.f32 %v483, %v486
    %v493 = vadd.f32 %v484, %v487
    %v494 = vadd.f32 %v485, %v488
    %v495 = vrot.slane %v444, 6
    %v496 = vrot.slane %v445, 6
    %v497 = vrot.slane %v446, 6
    %v501 = vadd.f32 %v492, %v495
    %v502 = vadd.f32 %v493, %v496
    %v503 = vadd.f32 %v494, %v497
    %v504 = vmul.f32 %v501, 0.5
    %v505 = vmul.f32 %v502, 0.5
    %v506 = vmul.f32 %v503, 0.5
    %v507 = vfloor.f32 %v504
    %v508 = vfloor.f32 %v505
    %v509 = vfloor.f32 %v506
    %v510 = vmul.f32 %v507, 2.0
    %v511 = vmul.f32 %v508, 2.0
    %v512 = vmul.f32 %v509, 2.0
    %v513 = vsub.f32 %v501, %v510
    %v514 = vsub.f32 %v502, %v511
    %v515 = vsub.f32 %v503, %v512
    %v516 = vmul.f32 %v513, 2.0
    %v517 = vmul.f32 %v514, 2.0
    %v518 = vmul.f32 %v515, 2.0
    %v519 = vsub.f32 1.0, %v516
    %v520 = vsub.f32 1.0, %v517
    %v521 = vsub.f32 1.0, %v518
    %v522 = vmul.f32 %v444, 2.0
    %v523 = vmul.f32 %v445, 2.0
    %v524 = vmul.f32 %v446, 2.0
    %v525 = vsub.f32 1.0, %v522
    %v526 = vsub.f32 1.0, %v523
    %v527 = vsub.f32 1.0, %v524
    %v528 = vperm.slane %v519, 0
    %v529 = vperm.slane %v520, 0
    %v530 = vperm.slane %v521, 0
    %v531 = vmul.f32 %v528, %v525
    %v532 = vmul.f32 %v529, %v526
    %v533 = vmul.f32 %v530, %v527
    %v534 = vsub.f32 0.0, %v435
    %v535 = vsub.f32 0.0, %v436
    %v536 = vsub.f32 0.0, %v437
    %v537 = vmul.f32 %v534, %v531
    %v538 = vmul.f32 %v535, %v532
    %v539 = vmul.f32 %v536, %v533
    %v540 = vadd.f32 %v537, %v538
    %v541 = vadd.f32 %v540, %v539
    %v542 = vadd.f32 %v33, %v541
    %vm543 = vcmp.lt.f32.partialorder %v542, 0.0
    %v544 = vsel %vm543, 1, 0
    %v545 = vcvt.s32.f32 %v544
    %v546 = vmul.f32 %v18, %v545
    %v547 = vmul.f32 %v23, %v545
    %v548 = vmul.f32 %v28, %v545
    %v552 = vrot.slane %v546, 1
    %v553 = vrot.slane %v547, 1
    %v554 = vrot.slane %v548, 1
    %v558 = vadd.f32 %v546, %v552
    %v559 = vadd.f32 %v547, %v553
    %v560 = vadd.f32 %v548, %v554
    %v561 = vrot.slane %v546, 2
    %v562 = vrot.slane %v547, 2
    %v563 = vrot.slane %v548, 2
    %v567 = vadd.f32 %v558, %v561
    %v568 = vadd.f32 %v559, %v562
    %v569 = vadd.f32 %v560, %v563
    %v570 = vrot.slane %v546, 3
    %v571 = vrot.slane %v547, 3
    %v572 = vrot.slane %v548, 3
    %v576 = vadd.f32 %v567, %v570
    %v577 = vadd.f32 %v568, %v571
    %v578 = vadd.f32 %v569, %v572
    %v579 = vrot.slane %v546, 4
    %v580 = vrot.slane %v547, 4
    %v581 = vrot.slane %v548, 4
    %v585 = vadd.f32 %v576, %v579
    %v586 = vadd.f32 %v577, %v580
    %v587 = vadd.f32 %v578, %v581
    %v588 = vrot.slane %v546, 5
    %v589 = vrot.slane %v547, 5
    %v590 = vrot.slane %v548, 5
    %v594 = vadd.f32 %v585, %v588
    %v595 = vadd.f32 %v586, %v589
    %v596 = vadd.f32 %v587, %v590
    %v597 = vrot.slane %v546, 6
    %v598 = vrot.slane %v547, 6
    %v599 = vrot.slane %v548, 6
    %v603 = vadd.f32 %v594, %v597
    %v604 = vadd.f32 %v595, %v598
    %v605 = vadd.f32 %v596, %v599
    %v606 = vmul.f32 %v603, 0.5
    %v607 = vmul.f32 %v604, 0.5
    %v608 = vmul.f32 %v605, 0.5
    %v609 = vfloor.f32 %v606
    %v610 = vfloor.f32 %v607
    %v611 = vfloor.f32 %v608
    %v612 = vmul.f32 %v609, 2.0
    %v613 = vmul.f32 %v610, 2.0
    %v614 = vmul.f32 %v611, 2.0
    %v615 = vsub.f32 %v603, %v612
    %v616 = vsub.f32 %v604, %v613
    %v617 = vsub.f32 %v605, %v614
    %v618 = vadd.f32 %v615, %v616
    %v619 = vadd.f32 %v618, %v617
    %vm620 = vcmp.eq.f32.partialorder %v619, 0.0
    %v621 = vsel %vm620, 1, 0
    %v622 = vcvt.s32.f32 %v621
    %v623 = vmul.f32 %v18, %v542
    %v624 = vmul.f32 %v23, %v542
    %v625 = vmul.f32 %v28, %v542
    %v626 = vsub.f32 %v623, %v537
    %v627 = vsub.f32 %v624, %v538
    %v628 = vsub.f32 %v625, %v539
    %v629 = vmax.f32 %v327, %v622
    %v630 = vsel %vm335, %v331, %v542
    %vm631 = vcmp.gt.f32.partialorder %v629, 0.5
    %v632 = vsel %vm631, 1, 0
    %v633 = vperm.slane %v632, 0
    %vm634 = vcmp.eq.s32.totalorder %v633, 1
    %v635 = vsel %vm634, %v336, %v626
    %v636 = vsel %vm634, %v337, %v627
    %v637 = vsel %vm634, %v338, %v628
    %v638 = vmul.f32 %v635, 0.5
    %v639 = vmul.f32 %v636, 0.5
    %v640 = vmul.f32 %v637, 0.5
    %v641 = vtanh.pop %v638
    %v642 = vtanh.pop %v639
    %v643 = vtanh.pop %v640
    %v644 = vand.u32 2147483647, %v641
    %v645 = vand.u32 2147483647, %v642
    %v646 = vand.u32 2147483647, %v643
    %v647 = vlog2.pop %v644
    %v648 = vmul.f32 %v647, 0.6931472
    %v649 = vlog2.pop %v645
    %v650 = vmul.f32 %v649, 0.6931472
    %v651 = vlog2.pop %v646
    %v652 = vmul.f32 %v651, 0.6931472
    %v653 = vsel %vm30, %v648, 0.0
    %v654 = vsel %vm31, %v650, 0.0
    %v655 = vsel %vm32, %v652, 0.0
    %v659 = vrot.slane %v653, 1
    %v660 = vrot.slane %v654, 1
    %v661 = vrot.slane %v655, 1
    %v665 = vadd.f32 %v653, %v659
    %v666 = vadd.f32 %v654, %v660
    %v667 = vadd.f32 %v655, %v661
    %v668 = vrot.slane %v653, 2
    %v669 = vrot.slane %v654, 2
    %v670 = vrot.slane %v655, 2
    %v674 = vadd.f32 %v665, %v668
    %v675 = vadd.f32 %v666, %v669
    %v676 = vadd.f32 %v667, %v670
    %v677 = vrot.slane %v653, 3
    %v678 = vrot.slane %v654, 3
    %v679 = vrot.slane %v655, 3
    %v683 = vadd.f32 %v674, %v677
    %v684 = vadd.f32 %v675, %v678
    %v685 = vadd.f32 %v676, %v679
    %v686 = vrot.slane %v653, 4
    %v687 = vrot.slane %v654, 4
    %v688 = vrot.slane %v655, 4
    %v692 = vadd.f32 %v683, %v686
    %v693 = vadd.f32 %v684, %v687
    %v694 = vadd.f32 %v685, %v688
    %v695 = vrot.slane %v653, 5
    %v696 = vrot.slane %v654, 5
    %v697 = vrot.slane %v655, 5
    %v701 = vadd.f32 %v692, %v695
    %v702 = vadd.f32 %v693, %v696
    %v703 = vadd.f32 %v694, %v697
    %v704 = vrot.slane %v653, 6
    %v705 = vrot.slane %v654, 6
    %v706 = vrot.slane %v655, 6
    %v710 = vadd.f32 %v701, %v704
    %v711 = vadd.f32 %v702, %v705
    %v712 = vadd.f32 %v703, %v706
    %v713 = vperm.slane %v710, 0
    %v714 = vperm.slane %v711, 0
    %v715 = vperm.slane %v712, 0
    %v716 = vsub.f32 %v713, %v653
    %v717 = vsub.f32 %v714, %v654
    %v718 = vsub.f32 %v715, %v655
    %v719 = vmul.f32 %v716, 0.5
    %v720 = vmul.f32 %v717, 0.5
    %v721 = vmul.f32 %v718, 0.5
    %v722 = vtanh.pop %v719
    %v723 = vtanh.pop %v720
    %v724 = vtanh.pop %v721
    %v725 = vand.u32 2147483647, %v722
    %v726 = vand.u32 2147483647, %v723
    %v727 = vand.u32 2147483647, %v724
    %v728 = vlog2.pop %v725
    %v729 = vmul.f32 %v728, 0.6931472
    %v730 = vlog2.pop %v726
    %v731 = vmul.f32 %v730, 0.6931472
    %v732 = vlog2.pop %v727
    %v733 = vmul.f32 %v732, 0.6931472
    %v734 = vsel %vm30, %v729, 0.0
    %v735 = vsel %vm31, %v731, 0.0
    %v736 = vsel %vm32, %v733, 0.0
    %vm737 = vcmp.lt.f32.partialorder %v635, 0.0
    %vm738 = vcmp.lt.f32.partialorder %v636, 0.0
    %vm739 = vcmp.lt.f32.partialorder %v637, 0.0
    %v740 = vsel %vm737, 1, 0
    %v741 = vsel %vm738, 1, 0
    %v742 = vsel %vm739, 1, 0
    %v743 = vcvt.s32.f32 %v740
    %v744 = vcvt.s32.f32 %v741
    %v745 = vcvt.s32.f32 %v742
    %v749 = vrot.slane %v743, 1
    %v750 = vrot.slane %v744, 1
    %v751 = vrot.slane %v745, 1
    %v755 = vadd.f32 %v743, %v749
    %v756 = vadd.f32 %v744, %v750
    %v757 = vadd.f32 %v745, %v751
    %v758 = vrot.slane %v743, 2
    %v759 = vrot.slane %v744, 2
    %v760 = vrot.slane %v745, 2
    %v764 = vadd.f32 %v755, %v758
    %v765 = vadd.f32 %v756, %v759
    %v766 = vadd.f32 %v757, %v760
    %v767 = vrot.slane %v743, 3
    %v768 = vrot.slane %v744, 3
    %v769 = vrot.slane %v745, 3
    %v773 = vadd.f32 %v764, %v767
    %v774 = vadd.f32 %v765, %v768
    %v775 = vadd.f32 %v766, %v769
    %v776 = vrot.slane %v743, 4
    %v777 = vrot.slane %v744, 4
    %v778 = vrot.slane %v745, 4
    %v782 = vadd.f32 %v773, %v776
    %v783 = vadd.f32 %v774, %v777
    %v784 = vadd.f32 %v775, %v778
    %v785 = vrot.slane %v743, 5
    %v786 = vrot.slane %v744, 5
    %v787 = vrot.slane %v745, 5
    %v791 = vadd.f32 %v782, %v785
    %v792 = vadd.f32 %v783, %v786
    %v793 = vadd.f32 %v784, %v787
    %v794 = vrot.slane %v743, 6
    %v795 = vrot.slane %v744, 6
    %v796 = vrot.slane %v745, 6
    %v800 = vadd.f32 %v791, %v794
    %v801 = vadd.f32 %v792, %v795
    %v802 = vadd.f32 %v793, %v796
    %v803 = vmul.f32 %v800, 0.5
    %v804 = vmul.f32 %v801, 0.5
    %v805 = vmul.f32 %v802, 0.5
    %v806 = vfloor.f32 %v803
    %v807 = vfloor.f32 %v804
    %v808 = vfloor.f32 %v805
    %v809 = vmul.f32 %v806, 2.0
    %v810 = vmul.f32 %v807, 2.0
    %v811 = vmul.f32 %v808, 2.0
    %v812 = vsub.f32 %v800, %v809
    %v813 = vsub.f32 %v801, %v810
    %v814 = vsub.f32 %v802, %v811
    %v815 = vmul.f32 %v812, 2.0
    %v816 = vmul.f32 %v813, 2.0
    %v817 = vmul.f32 %v814, 2.0
    %v818 = vsub.f32 1.0, %v815
    %v819 = vsub.f32 1.0, %v816
    %v820 = vsub.f32 1.0, %v817
    %v821 = vmul.f32 %v743, 2.0
    %v822 = vmul.f32 %v744, 2.0
    %v823 = vmul.f32 %v745, 2.0
    %v824 = vsub.f32 1.0, %v821
    %v825 = vsub.f32 1.0, %v822
    %v826 = vsub.f32 1.0, %v823
    %v827 = vperm.slane %v818, 0
    %v828 = vperm.slane %v819, 0
    %v829 = vperm.slane %v820, 0
    %v830 = vmul.f32 %v827, %v824
    %v831 = vmul.f32 %v828, %v825
    %v832 = vmul.f32 %v829, %v826
    %v833 = vsub.f32 0.0, %v734
    %v834 = vsub.f32 0.0, %v735
    %v835 = vsub.f32 0.0, %v736
    %v836 = vmul.f32 %v833, %v830
    %v837 = vmul.f32 %v834, %v831
    %v838 = vmul.f32 %v835, %v832
    %v839 = vadd.f32 %v836, %v837
    %v840 = vadd.f32 %v839, %v838
    %v841 = vadd.f32 %v33, %v840
    %vm842 = vcmp.lt.f32.partialorder %v841, 0.0
    %v843 = vsel %vm842, 1, 0
    %v844 = vcvt.s32.f32 %v843
    %v845 = vmul.f32 %v18, %v844
    %v846 = vmul.f32 %v23, %v844
    %v847 = vmul.f32 %v28, %v844
    %v851 = vrot.slane %v845, 1
    %v852 = vrot.slane %v846, 1
    %v853 = vrot.slane %v847, 1
    %v857 = vadd.f32 %v845, %v851
    %v858 = vadd.f32 %v846, %v852
    %v859 = vadd.f32 %v847, %v853
    %v860 = vrot.slane %v845, 2
    %v861 = vrot.slane %v846, 2
    %v862 = vrot.slane %v847, 2
    %v866 = vadd.f32 %v857, %v860
    %v867 = vadd.f32 %v858, %v861
    %v868 = vadd.f32 %v859, %v862
    %v869 = vrot.slane %v845, 3
    %v870 = vrot.slane %v846, 3
    %v871 = vrot.slane %v847, 3
    %v875 = vadd.f32 %v866, %v869
    %v876 = vadd.f32 %v867, %v870
    %v877 = vadd.f32 %v868, %v871
    %v878 = vrot.slane %v845, 4
    %v879 = vrot.slane %v846, 4
    %v880 = vrot.slane %v847, 4
    %v884 = vadd.f32 %v875, %v878
    %v885 = vadd.f32 %v876, %v879
    %v886 = vadd.f32 %v877, %v880
    %v887 = vrot.slane %v845, 5
    %v888 = vrot.slane %v846, 5
    %v889 = vrot.slane %v847, 5
    %v893 = vadd.f32 %v884, %v887
    %v894 = vadd.f32 %v885, %v888
    %v895 = vadd.f32 %v886, %v889
    %v896 = vrot.slane %v845, 6
    %v897 = vrot.slane %v846, 6
    %v898 = vrot.slane %v847, 6
    %v902 = vadd.f32 %v893, %v896
    %v903 = vadd.f32 %v894, %v897
    %v904 = vadd.f32 %v895, %v898
    %v905 = vmul.f32 %v902, 0.5
    %v906 = vmul.f32 %v903, 0.5
    %v907 = vmul.f32 %v904, 0.5
    %v908 = vfloor.f32 %v905
    %v909 = vfloor.f32 %v906
    %v910 = vfloor.f32 %v907
    %v911 = vmul.f32 %v908, 2.0
    %v912 = vmul.f32 %v909, 2.0
    %v913 = vmul.f32 %v910, 2.0
    %v914 = vsub.f32 %v902, %v911
    %v915 = vsub.f32 %v903, %v912
    %v916 = vsub.f32 %v904, %v913
    %v917 = vadd.f32 %v914, %v915
    %v918 = vadd.f32 %v917, %v916
    %vm919 = vcmp.eq.f32.partialorder %v918, 0.0
    %v920 = vsel %vm919, 1, 0
    %v921 = vcvt.s32.f32 %v920
    %v922 = vmul.f32 %v18, %v841
    %v923 = vmul.f32 %v23, %v841
    %v924 = vmul.f32 %v28, %v841
    %v925 = vsub.f32 %v922, %v836
    %v926 = vsub.f32 %v923, %v837
    %v927 = vsub.f32 %v924, %v838
    %v928 = vmax.f32 %v629, %v921
    %v929 = vsel %vm634, %v630, %v841
    %vm930 = vcmp.gt.f32.partialorder %v928, 0.5
    %v931 = vsel %vm930, 1, 0
    %v932 = vperm.slane %v931, 0
    %vm933 = vcmp.eq.s32.totalorder %v932, 1
    %v934 = vsel %vm933, %v635, %v925
    %v935 = vsel %vm933, %v636, %v926
    %v936 = vsel %vm933, %v637, %v927
    %v937 = vmul.f32 %v934, 0.5
    %v938 = vmul.f32 %v935, 0.5
    %v939 = vmul.f32 %v936, 0.5
    %v940 = vtanh.pop %v937
    %v941 = vtanh.pop %v938
    %v942 = vtanh.pop %v939
    %v943 = vand.u32 2147483647, %v940
    %v944 = vand.u32 2147483647, %v941
    %v945 = vand.u32 2147483647, %v942
    %v946 = vlog2.pop %v943
    %v947 = vmul.f32 %v946, 0.6931472
    %v948 = vlog2.pop %v944
    %v949 = vmul.f32 %v948, 0.6931472
    %v950 = vlog2.pop %v945
    %v951 = vmul.f32 %v950, 0.6931472
    %v952 = vsel %vm30, %v947, 0.0
    %v953 = vsel %vm31, %v949, 0.0
    %v954 = vsel %vm32, %v951, 0.0
    %v958 = vrot.slane %v952, 1
    %v959 = vrot.slane %v953, 1
    %v960 = vrot.slane %v954, 1
    %v964 = vadd.f32 %v952, %v958
    %v965 = vadd.f32 %v953, %v959
    %v966 = vadd.f32 %v954, %v960
    %v967 = vrot.slane %v952, 2
    %v968 = vrot.slane %v953, 2
    %v969 = vrot.slane %v954, 2
    %v973 = vadd.f32 %v964, %v967
    %v974 = vadd.f32 %v965, %v968
    %v975 = vadd.f32 %v966, %v969
    %v976 = vrot.slane %v952, 3
    %v977 = vrot.slane %v953, 3
    %v978 = vrot.slane %v954, 3
    %v982 = vadd.f32 %v973, %v976
    %v983 = vadd.f32 %v974, %v977
    %v984 = vadd.f32 %v975, %v978
    %v985 = vrot.slane %v952, 4
    %v986 = vrot.slane %v953, 4
    %v987 = vrot.slane %v954, 4
    %v991 = vadd.f32 %v982, %v985
    %v992 = vadd.f32 %v983, %v986
    %v993 = vadd.f32 %v984, %v987
    %v994 = vrot.slane %v952, 5
    %v995 = vrot.slane %v953, 5
    %v996 = vrot.slane %v954, 5
    %v1000 = vadd.f32 %v991, %v994
    %v1001 = vadd.f32 %v992, %v995
    %v1002 = vadd.f32 %v993, %v996
    %v1003 = vrot.slane %v952, 6
    %v1004 = vrot.slane %v953, 6
    %v1005 = vrot.slane %v954, 6
    %v1009 = vadd.f32 %v1000, %v1003
    %v1010 = vadd.f32 %v1001, %v1004
    %v1011 = vadd.f32 %v1002, %v1005
    %v1012 = vperm.slane %v1009, 0
    %v1013 = vperm.slane %v1010, 0
    %v1014 = vperm.slane %v1011, 0
    %v1015 = vsub.f32 %v1012, %v952
    %v1016 = vsub.f32 %v1013, %v953
    %v1017 = vsub.f32 %v1014, %v954
    %v1018 = vmul.f32 %v1015, 0.5
    %v1019 = vmul.f32 %v1016, 0.5
    %v1020 = vmul.f32 %v1017, 0.5
    %v1021 = vtanh.pop %v1018
    %v1022 = vtanh.pop %v1019
    %v1023 = vtanh.pop %v1020
    %v1024 = vand.u32 2147483647, %v1021
    %v1025 = vand.u32 2147483647, %v1022
    %v1026 = vand.u32 2147483647, %v1023
    %v1027 = vlog2.pop %v1024
    %v1028 = vmul.f32 %v1027, 0.6931472
    %v1029 = vlog2.pop %v1025
    %v1030 = vmul.f32 %v1029, 0.6931472
    %v1031 = vlog2.pop %v1026
    %v1032 = vmul.f32 %v1031, 0.6931472
    %v1033 = vsel %vm30, %v1028, 0.0
    %v1034 = vsel %vm31, %v1030, 0.0
    %v1035 = vsel %vm32, %v1032, 0.0
    %vm1036 = vcmp.lt.f32.partialorder %v934, 0.0
    %vm1037 = vcmp.lt.f32.partialorder %v935, 0.0
    %vm1038 = vcmp.lt.f32.partialorder %v936, 0.0
    %v1039 = vsel %vm1036, 1, 0
    %v1040 = vsel %vm1037, 1, 0
    %v1041 = vsel %vm1038, 1, 0
    %v1042 = vcvt.s32.f32 %v1039
    %v1043 = vcvt.s32.f32 %v1040
    %v1044 = vcvt.s32.f32 %v1041
    %v1048 = vrot.slane %v1042, 1
    %v1049 = vrot.slane %v1043, 1
    %v1050 = vrot.slane %v1044, 1
    %v1054 = vadd.f32 %v1042, %v1048
    %v1055 = vadd.f32 %v1043, %v1049
    %v1056 = vadd.f32 %v1044, %v1050
    %v1057 = vrot.slane %v1042, 2
    %v1058 = vrot.slane %v1043, 2
    %v1059 = vrot.slane %v1044, 2
    %v1063 = vadd.f32 %v1054, %v1057
    %v1064 = vadd.f32 %v1055, %v1058
    %v1065 = vadd.f32 %v1056, %v1059
    %v1066 = vrot.slane %v1042, 3
    %v1067 = vrot.slane %v1043, 3
    %v1068 = vrot.slane %v1044, 3
    %v1072 = vadd.f32 %v1063, %v1066
    %v1073 = vadd.f32 %v1064, %v1067
    %v1074 = vadd.f32 %v1065, %v1068
    %v1075 = vrot.slane %v1042, 4
    %v1076 = vrot.slane %v1043, 4
    %v1077 = vrot.slane %v1044, 4
    %v1081 = vadd.f32 %v1072, %v1075
    %v1082 = vadd.f32 %v1073, %v1076
    %v1083 = vadd.f32 %v1074, %v1077
    %v1084 = vrot.slane %v1042, 5
    %v1085 = vrot.slane %v1043, 5
    %v1086 = vrot.slane %v1044, 5
    %v1090 = vadd.f32 %v1081, %v1084
    %v1091 = vadd.f32 %v1082, %v1085
    %v1092 = vadd.f32 %v1083, %v1086
    %v1093 = vrot.slane %v1042, 6
    %v1094 = vrot.slane %v1043, 6
    %v1095 = vrot.slane %v1044, 6
    %v1099 = vadd.f32 %v1090, %v1093
    %v1100 = vadd.f32 %v1091, %v1094
    %v1101 = vadd.f32 %v1092, %v1095
    %v1102 = vmul.f32 %v1099, 0.5
    %v1103 = vmul.f32 %v1100, 0.5
    %v1104 = vmul.f32 %v1101, 0.5
    %v1105 = vfloor.f32 %v1102
    %v1106 = vfloor.f32 %v1103
    %v1107 = vfloor.f32 %v1104
    %v1108 = vmul.f32 %v1105, 2.0
    %v1109 = vmul.f32 %v1106, 2.0
    %v1110 = vmul.f32 %v1107, 2.0
    %v1111 = vsub.f32 %v1099, %v1108
    %v1112 = vsub.f32 %v1100, %v1109
    %v1113 = vsub.f32 %v1101, %v1110
    %v1114 = vmul.f32 %v1111, 2.0
    %v1115 = vmul.f32 %v1112, 2.0
    %v1116 = vmul.f32 %v1113, 2.0
    %v1117 = vsub.f32 1.0, %v1114
    %v1118 = vsub.f32 1.0, %v1115
    %v1119 = vsub.f32 1.0, %v1116
    %v1120 = vmul.f32 %v1042, 2.0
    %v1121 = vmul.f32 %v1043, 2.0
    %v1122 = vmul.f32 %v1044, 2.0
    %v1123 = vsub.f32 1.0, %v1120
    %v1124 = vsub.f32 1.0, %v1121
    %v1125 = vsub.f32 1.0, %v1122
    %v1126 = vperm.slane %v1117, 0
    %v1127 = vperm.slane %v1118, 0
    %v1128 = vperm.slane %v1119, 0
    %v1129 = vmul.f32 %v1126, %v1123
    %v1130 = vmul.f32 %v1127, %v1124
    %v1131 = vmul.f32 %v1128, %v1125
    %v1132 = vsub.f32 0.0, %v1033
    %v1133 = vsub.f32 0.0, %v1034
    %v1134 = vsub.f32 0.0, %v1035
    %v1135 = vmul.f32 %v1132, %v1129
    %v1136 = vmul.f32 %v1133, %v1130
    %v1137 = vmul.f32 %v1134, %v1131
    %v1138 = vadd.f32 %v1135, %v1136
    %v1139 = vadd.f32 %v1138, %v1137
    %v1140 = vadd.f32 %v33, %v1139
    %vm1141 = vcmp.lt.f32.partialorder %v1140, 0.0
    %v1142 = vsel %vm1141, 1, 0
    %v1143 = vcvt.s32.f32 %v1142
    %v1144 = vmul.f32 %v18, %v1143
    %v1145 = vmul.f32 %v23, %v1143
    %v1146 = vmul.f32 %v28, %v1143
    %v1150 = vrot.slane %v1144, 1
    %v1151 = vrot.slane %v1145, 1
    %v1152 = vrot.slane %v1146, 1
    %v1156 = vadd.f32 %v1144, %v1150
    %v1157 = vadd.f32 %v1145, %v1151
    %v1158 = vadd.f32 %v1146, %v1152
    %v1159 = vrot.slane %v1144, 2
    %v1160 = vrot.slane %v1145, 2
    %v1161 = vrot.slane %v1146, 2
    %v1165 = vadd.f32 %v1156, %v1159
    %v1166 = vadd.f32 %v1157, %v1160
    %v1167 = vadd.f32 %v1158, %v1161
    %v1168 = vrot.slane %v1144, 3
    %v1169 = vrot.slane %v1145, 3
    %v1170 = vrot.slane %v1146, 3
    %v1174 = vadd.f32 %v1165, %v1168
    %v1175 = vadd.f32 %v1166, %v1169
    %v1176 = vadd.f32 %v1167, %v1170
    %v1177 = vrot.slane %v1144, 4
    %v1178 = vrot.slane %v1145, 4
    %v1179 = vrot.slane %v1146, 4
    %v1183 = vadd.f32 %v1174, %v1177
    %v1184 = vadd.f32 %v1175, %v1178
    %v1185 = vadd.f32 %v1176, %v1179
    %v1186 = vrot.slane %v1144, 5
    %v1187 = vrot.slane %v1145, 5
    %v1188 = vrot.slane %v1146, 5
    %v1192 = vadd.f32 %v1183, %v1186
    %v1193 = vadd.f32 %v1184, %v1187
    %v1194 = vadd.f32 %v1185, %v1188
    %v1195 = vrot.slane %v1144, 6
    %v1196 = vrot.slane %v1145, 6
    %v1197 = vrot.slane %v1146, 6
    %v1201 = vadd.f32 %v1192, %v1195
    %v1202 = vadd.f32 %v1193, %v1196
    %v1203 = vadd.f32 %v1194, %v1197
    %v1204 = vmul.f32 %v1201, 0.5
    %v1205 = vmul.f32 %v1202, 0.5
    %v1206 = vmul.f32 %v1203, 0.5
    %v1207 = vfloor.f32 %v1204
    %v1208 = vfloor.f32 %v1205
    %v1209 = vfloor.f32 %v1206
    %v1210 = vmul.f32 %v1207, 2.0
    %v1211 = vmul.f32 %v1208, 2.0
    %v1212 = vmul.f32 %v1209, 2.0
    %v1213 = vsub.f32 %v1201, %v1210
    %v1214 = vsub.f32 %v1202, %v1211
    %v1215 = vsub.f32 %v1203, %v1212
    %v1216 = vadd.f32 %v1213, %v1214
    %v1217 = vadd.f32 %v1216, %v1215
    %vm1218 = vcmp.eq.f32.partialorder %v1217, 0.0
    %v1219 = vsel %vm1218, 1, 0
    %v1220 = vcvt.s32.f32 %v1219
    %v1221 = vmul.f32 %v18, %v1140
    %v1222 = vmul.f32 %v23, %v1140
    %v1223 = vmul.f32 %v28, %v1140
    %v1224 = vsub.f32 %v1221, %v1135
    %v1225 = vsub.f32 %v1222, %v1136
    %v1226 = vsub.f32 %v1223, %v1137
    %v1227 = vmax.f32 %v928, %v1220
    %v1228 = vsel %vm933, %v929, %v1140
    %vm1229 = vcmp.gt.f32.partialorder %v1227, 0.5
    %v1230 = vsel %vm1229, 1, 0
    %v1231 = vperm.slane %v1230, 0
    %vm1232 = vcmp.eq.s32.totalorder %v1231, 1
    %v1233 = vsel %vm1232, %v934, %v1224
    %v1234 = vsel %vm1232, %v935, %v1225
    %v1235 = vsel %vm1232, %v936, %v1226
    %v1236 = vmul.f32 %v1233, 0.5
    %v1237 = vmul.f32 %v1234, 0.5
    %v1238 = vmul.f32 %v1235, 0.5
    %v1239 = vtanh.pop %v1236
    %v1240 = vtanh.pop %v1237
    %v1241 = vtanh.pop %v1238
    %v1242 = vand.u32 2147483647, %v1239
    %v1243 = vand.u32 2147483647, %v1240
    %v1244 = vand.u32 2147483647, %v1241
    %v1245 = vlog2.pop %v1242
    %v1246 = vmul.f32 %v1245, 0.6931472
    %v1247 = vlog2.pop %v1243
    %v1248 = vmul.f32 %v1247, 0.6931472
    %v1249 = vlog2.pop %v1244
    %v1250 = vmul.f32 %v1249, 0.6931472
    %v1251 = vsel %vm30, %v1246, 0.0
    %v1252 = vsel %vm31, %v1248, 0.0
    %v1253 = vsel %vm32, %v1250, 0.0
    %v1257 = vrot.slane %v1251, 1
    %v1258 = vrot.slane %v1252, 1
    %v1259 = vrot.slane %v1253, 1
    %v1263 = vadd.f32 %v1251, %v1257
    %v1264 = vadd.f32 %v1252, %v1258
    %v1265 = vadd.f32 %v1253, %v1259
    %v1266 = vrot.slane %v1251, 2
    %v1267 = vrot.slane %v1252, 2
    %v1268 = vrot.slane %v1253, 2
    %v1272 = vadd.f32 %v1263, %v1266
    %v1273 = vadd.f32 %v1264, %v1267
    %v1274 = vadd.f32 %v1265, %v1268
    %v1275 = vrot.slane %v1251, 3
    %v1276 = vrot.slane %v1252, 3
    %v1277 = vrot.slane %v1253, 3
    %v1281 = vadd.f32 %v1272, %v1275
    %v1282 = vadd.f32 %v1273, %v1276
    %v1283 = vadd.f32 %v1274, %v1277
    %v1284 = vrot.slane %v1251, 4
    %v1285 = vrot.slane %v1252, 4
    %v1286 = vrot.slane %v1253, 4
    %v1290 = vadd.f32 %v1281, %v1284
    %v1291 = vadd.f32 %v1282, %v1285
    %v1292 = vadd.f32 %v1283, %v1286
    %v1293 = vrot.slane %v1251, 5
    %v1294 = vrot.slane %v1252, 5
    %v1295 = vrot.slane %v1253, 5
    %v1299 = vadd.f32 %v1290, %v1293
    %v1300 = vadd.f32 %v1291, %v1294
    %v1301 = vadd.f32 %v1292, %v1295
    %v1302 = vrot.slane %v1251, 6
    %v1303 = vrot.slane %v1252, 6
    %v1304 = vrot.slane %v1253, 6
    %v1308 = vadd.f32 %v1299, %v1302
    %v1309 = vadd.f32 %v1300, %v1303
    %v1310 = vadd.f32 %v1301, %v1304
    %v1311 = vperm.slane %v1308, 0
    %v1312 = vperm.slane %v1309, 0
    %v1313 = vperm.slane %v1310, 0
    %v1314 = vsub.f32 %v1311, %v1251
    %v1315 = vsub.f32 %v1312, %v1252
    %v1316 = vsub.f32 %v1313, %v1253
    %v1317 = vmul.f32 %v1314, 0.5
    %v1318 = vmul.f32 %v1315, 0.5
    %v1319 = vmul.f32 %v1316, 0.5
    %v1320 = vtanh.pop %v1317
    %v1321 = vtanh.pop %v1318
    %v1322 = vtanh.pop %v1319
    %v1323 = vand.u32 2147483647, %v1320
    %v1324 = vand.u32 2147483647, %v1321
    %v1325 = vand.u32 2147483647, %v1322
    %v1326 = vlog2.pop %v1323
    %v1327 = vmul.f32 %v1326, 0.6931472
    %v1328 = vlog2.pop %v1324
    %v1329 = vmul.f32 %v1328, 0.6931472
    %v1330 = vlog2.pop %v1325
    %v1331 = vmul.f32 %v1330, 0.6931472
    %v1332 = vsel %vm30, %v1327, 0.0
    %v1333 = vsel %vm31, %v1329, 0.0
    %v1334 = vsel %vm32, %v1331, 0.0
    %vm1335 = vcmp.lt.f32.partialorder %v1233, 0.0
    %vm1336 = vcmp.lt.f32.partialorder %v1234, 0.0
    %vm1337 = vcmp.lt.f32.partialorder %v1235, 0.0
    %v1338 = vsel %vm1335, 1, 0
    %v1339 = vsel %vm1336, 1, 0
    %v1340 = vsel %vm1337, 1, 0
    %v1341 = vcvt.s32.f32 %v1338
    %v1342 = vcvt.s32.f32 %v1339
    %v1343 = vcvt.s32.f32 %v1340
    %v1347 = vrot.slane %v1341, 1
    %v1348 = vrot.slane %v1342, 1
    %v1349 = vrot.slane %v1343, 1
    %v1353 = vadd.f32 %v1341, %v1347
    %v1354 = vadd.f32 %v1342, %v1348
    %v1355 = vadd.f32 %v1343, %v1349
    %v1356 = vrot.slane %v1341, 2
    %v1357 = vrot.slane %v1342, 2
    %v1358 = vrot.slane %v1343, 2
    %v1362 = vadd.f32 %v1353, %v1356
    %v1363 = vadd.f32 %v1354, %v1357
    %v1364 = vadd.f32 %v1355, %v1358
    %v1365 = vrot.slane %v1341, 3
    %v1366 = vrot.slane %v1342, 3
    %v1367 = vrot.slane %v1343, 3
    %v1371 = vadd.f32 %v1362, %v1365
    %v1372 = vadd.f32 %v1363, %v1366
    %v1373 = vadd.f32 %v1364, %v1367
    %v1374 = vrot.slane %v1341, 4
    %v1375 = vrot.slane %v1342, 4
    %v1376 = vrot.slane %v1343, 4
    %v1380 = vadd.f32 %v1371, %v1374
    %v1381 = vadd.f32 %v1372, %v1375
    %v1382 = vadd.f32 %v1373, %v1376
    %v1383 = vrot.slane %v1341, 5
    %v1384 = vrot.slane %v1342, 5
    %v1385 = vrot.slane %v1343, 5
    %v1389 = vadd.f32 %v1380, %v1383
    %v1390 = vadd.f32 %v1381, %v1384
    %v1391 = vadd.f32 %v1382, %v1385
    %v1392 = vrot.slane %v1341, 6
    %v1393 = vrot.slane %v1342, 6
    %v1394 = vrot.slane %v1343, 6
    %v1398 = vadd.f32 %v1389, %v1392
    %v1399 = vadd.f32 %v1390, %v1393
    %v1400 = vadd.f32 %v1391, %v1394
    %v1401 = vmul.f32 %v1398, 0.5
    %v1402 = vmul.f32 %v1399, 0.5
    %v1403 = vmul.f32 %v1400, 0.5
    %v1404 = vfloor.f32 %v1401
    %v1405 = vfloor.f32 %v1402
    %v1406 = vfloor.f32 %v1403
    %v1407 = vmul.f32 %v1404, 2.0
    %v1408 = vmul.f32 %v1405, 2.0
    %v1409 = vmul.f32 %v1406, 2.0
    %v1410 = vsub.f32 %v1398, %v1407
    %v1411 = vsub.f32 %v1399, %v1408
    %v1412 = vsub.f32 %v1400, %v1409
    %v1413 = vmul.f32 %v1410, 2.0
    %v1414 = vmul.f32 %v1411, 2.0
    %v1415 = vmul.f32 %v1412, 2.0
    %v1416 = vsub.f32 1.0, %v1413
    %v1417 = vsub.f32 1.0, %v1414
    %v1418 = vsub.f32 1.0, %v1415
    %v1419 = vmul.f32 %v1341, 2.0
    %v1420 = vmul.f32 %v1342, 2.0
    %v1421 = vmul.f32 %v1343, 2.0
    %v1422 = vsub.f32 1.0, %v1419
    %v1423 = vsub.f32 1.0, %v1420
    %v1424 = vsub.f32 1.0, %v1421
    %v1425 = vperm.slane %v1416, 0
    %v1426 = vperm.slane %v1417, 0
    %v1427 = vperm.slane %v1418, 0
    %v1428 = vmul.f32 %v1425, %v1422
    %v1429 = vmul.f32 %v1426, %v1423
    %v1430 = vmul.f32 %v1427, %v1424
    %v1431 = vsub.f32 0.0, %v1332
    %v1432 = vsub.f32 0.0, %v1333
    %v1433 = vsub.f32 0.0, %v1334
    %v1434 = vmul.f32 %v1431, %v1428
    %v1435 = vmul.f32 %v1432, %v1429
    %v1436 = vmul.f32 %v1433, %v1430
    %v1437 = vadd.f32 %v1434, %v1435
    %v1438 = vadd.f32 %v1437, %v1436
    %v1439 = vadd.f32 %v33, %v1438
    %v1440 = vsel %vm1232, %v1228, %v1439
    %1441 = vst [vmem:[#allocation2] sm:$0x7f] %v1440
    // Predicated region
    $region10: #{tpu_custom_call.1} parent=1 // pred_check
      _
    $region11: #{tpu_custom_call.1} parent=1 // pred_check_branch
      %1443 = sbr.rel (0) target = $region13
    $region12: #{tpu_custom_call.1} parent=1 // pred_region
      %1445 = vsyncadd [#allocation3], 0
      %s1447 = sshll.u32 [#allocation2], 4
      %s1448 = int_to_ptr.vmem [resolvable:$true] %s1447
      %s1449 = sshll.u32 %s2, 4
      %s1450 = int_to_ptr.hbm [resolvable:$true] %s1449
      %1452 = dma.vmem_to_hbm [thread:$0]  %s1448, 128, %s1450, [#allocation3]
    $region13: #{tpu_custom_call.1} parent=1 // pred_fallthru
      _
    // Predicated region
    $region14: #{tpu_custom_call.1} parent=1 // pred_check
      _
    $region15: #{tpu_custom_call.1} parent=1 // pred_check_branch
      %1454 = sbr.rel (0) target = $region17
    $region16: #{tpu_custom_call.1} parent=1 // pred_region
      %1456 = dma.done [#allocation3], 128
    $region17: #{tpu_custom_call.1} parent=1 // pred_fallthru
      _
    %1457 = vsyncpa [#allocation3], 1

</llo_original>
